<compile_context>
chip_gen: v6e
topology: v6e:2x2x1
jax: 0.10.0
libtpu: 0.0.40
codegen_flags: <defaults>
</compile_context>

<pallas_src>
import functools

import numpy as np
import jax
import jax.numpy as jnp
from jax import lax
from jax.experimental import pallas as pl
from jax.experimental.pallas import tpu as pltpu


# ----------------------------------------------------------------------------
# Kernel 1: GT <-> prior matching + encoding.
#   grid = (B, 2, NPT): batch (parallel), phase, prior tile.
#   phase 0: scan per-GT best prior into (O,1) scratch (running max/argmax).
#   phase 1: per-prior best GT, force-match, one-hot MXU gather, SSD encode.
#   priors arrive channel-major (9, P_pad): cx, cy, w, h, x1, y1, x2, y2, area.
#   outputs are channel-major (B,4,P_pad) / (B,1,P_pad).
# ----------------------------------------------------------------------------
def match_kernel(truths_ref, labels_ref, priors_ref, loc_t_ref, conf_t_ref,
                 bpo_ref, bpi_ref, *, threshold, num_objs):
    ph = pl.program_id(1)            # 0: scan best prior per GT, 1: emit matches
    t = pl.program_id(2)             # prior tile index
    O = num_objs

    truths = truths_ref[0]                                    # (O, 4)
    pri = priors_ref[...]                                     # (9, TP)
    TP = pri.shape[1]

    px1, py1, px2, py2 = pri[4:5], pri[5:6], pri[6:7], pri[7:8]
    area_p = pri[8:9]
    t_x1, t_y1 = truths[:, 0:1], truths[:, 1:2]
    t_x2, t_y2 = truths[:, 2:3], truths[:, 3:4]

    # IoU between every GT box and this tile's point-form priors: (O, TP)
    iw = jnp.maximum(jnp.minimum(t_x2, px2) - jnp.maximum(t_x1, px1), 0.0)
    ih = jnp.maximum(jnp.minimum(t_y2, py2) - jnp.maximum(t_y1, py1), 0.0)
    inter = iw * ih
    area_t = (t_x2 - t_x1) * (t_y2 - t_y1)                    # (O, 1)
    ov = inter / (area_t + area_p - inter + 1e-12)            # (O, TP)

    idx_o = lax.broadcasted_iota(jnp.int32, (O, TP), 0)
    idx_p = lax.broadcasted_iota(jnp.int32, (O, TP), 1) + t * TP   # global ids

    @pl.when(ph == 0)
    def _scan_best_prior():
        @pl.when(t == 0)
        def _init():
            bpo_ref[...] = jnp.full_like(bpo_ref, -1.0)
            bpi_ref[...] = jnp.zeros_like(bpi_ref)

        tile_max = jnp.max(ov, axis=1, keepdims=True)                      # (O, 1)
        tile_arg = jnp.min(jnp.where(ov >= tile_max, idx_p, 2147483647),
                           axis=1, keepdims=True)                          # (O, 1)
        better = tile_max > bpo_ref[...]   # strict > keeps the first global argmax
        bpi_ref[...] = jnp.where(better, tile_arg, bpi_ref[...])
        bpo_ref[...] = jnp.where(better, tile_max, bpo_ref[...])

    @pl.when(ph == 1)
    def _emit():
        labels = labels_ref[0]                                             # (O, 1)

        # best GT for each prior in this tile (first argmax over the O axis)
        bto = jnp.max(ov, axis=0, keepdims=True)                           # (1, TP)
        bti = jnp.min(jnp.where(ov >= bto, idx_o, O), axis=0, keepdims=True)

        # every GT keeps its globally-best prior (later GT wins on a clash)
        hit = idx_p == bpi_ref[...]                                        # (O, TP)
        forced = jnp.max(jnp.where(hit, idx_o, -1), axis=0, keepdims=True)
        is_forced = forced >= 0
        bti = jnp.where(is_forced, forced, bti)
        bto = jnp.where(is_forced, 2.0, bto)

        # one-hot gather of the matched GT box + label via one MXU matmul
        # (rows 5..7 of gt8 are zero padding).
        sel = (idx_o == bti).astype(jnp.float32)                           # (O, TP)
        gt8 = jnp.transpose(
            jnp.concatenate([truths, labels, jnp.zeros((O, 3), jnp.float32)],
                            axis=1), (1, 0))                               # (8, O)
        picked = jnp.dot(gt8, sel, preferred_element_type=jnp.float32,
                         precision=jax.lax.Precision.HIGHEST)              # (8, TP)
        mx1, my1 = picked[0:1], picked[1:2]
        mx2, my2 = picked[2:3], picked[3:4]
        lab = picked[4:5]

        conf_t_ref[0] = jnp.where(bto < threshold, 0.0, lab + 1.0)

        # SSD "encode" with variances (0.1, 0.2); eps guards padded/degenerate
        # priors and GT boxes.  Rows are stored directly (no concat temp).
        eps = 1e-12
        p_cx, p_cy = pri[0:1], pri[1:2]
        p_w = jnp.maximum(pri[2:3], eps)
        p_h = jnp.maximum(pri[3:4], eps)
        loc_t_ref[0, 0:1] = ((mx1 + mx2) * 0.5 - p_cx) / (0.1 * p_w)
        loc_t_ref[0, 1:2] = ((my1 + my2) * 0.5 - p_cy) / (0.1 * p_h)
        loc_t_ref[0, 2:3] = jnp.log(jnp.maximum(mx2 - mx1, eps) / p_w) / 0.2
        loc_t_ref[0, 3:4] = jnp.log(jnp.maximum(my2 - my1, eps) / p_h) / 0.2


# ----------------------------------------------------------------------------
# Kernel 2: per-prior losses.  grid = (B, NPT); batch "parallel", tile "arbitrary".
#   conf_data / loc_data stream in their native dtype (prior-major) and are
#   upcast in-VMEM; loc_t / conf_t are consumed channel-major.  Partial sums go
#   into VMEM vector accumulators; one cross-lane reduce per batch in the
#   epilogue.  The mining score c is emitted lane-dense into a (NPT, TP) block.
# ----------------------------------------------------------------------------
def loss_kernel(loc_d_ref, conf_d_ref, loc_t_ref, conf_t_ref,
                stats_ref, c_ref, acc_l_ref, acc_c_ref, acc_p_ref,
                *, num_real_priors):
    pt = pl.program_id(1)
    npt = pl.num_programs(1)

    @pl.when(pt == 0)
    def _init():
        acc_l_ref[...] = jnp.zeros_like(acc_l_ref)
        acc_c_ref[...] = jnp.zeros_like(acc_c_ref)
        acc_p_ref[...] = jnp.zeros_like(acc_p_ref)

    loc_d = loc_d_ref[0].astype(jnp.float32)            # (TP, 4)  bf16 -> f32
    conf_d = conf_d_ref[0].astype(jnp.float32)          # (TP, C)  bf16 -> f32
    loc_t = loc_t_ref[0]                                # (4, TP)  channel-major
    ct_row = conf_t_ref[0]                              # (1, TP)  channel-major
    TP, C = conf_d.shape

    pos_row = ct_row > 0.0                              # (1, TP)
    posf_row = pos_row.astype(jnp.float32)

    # ---- localization: smooth L1 (beta=1) over positives, channel-major.
    loc_d_cm = jnp.transpose(loc_d, (1, 0))             # (4, TP) small relayout
    d = jnp.where(pos_row, loc_d_cm - loc_t, 0.0)
    ad = jnp.abs(d)
    acc_l_ref[...] += jnp.where(ad < 1.0, 0.5 * d * d, ad - 0.5)

    # ---- single class-axis logsumexp (lane reduction), reused for the
    # hard-negative-mining score and the positive cross entropy.
    tgt_col = ct_row.reshape(TP, 1).astype(jnp.int32)                      # (TP, 1)
    cls_iota = lax.broadcasted_iota(jnp.int32, (TP, C), 1)
    gathered = jnp.sum(jnp.where(cls_iota == tgt_col, conf_d, 0.0),
                       axis=1, keepdims=True)                              # (TP, 1)
    row_max = jnp.max(conf_d, axis=1, keepdims=True)
    lse = jnp.log(jnp.sum(jnp.exp(conf_d - row_max),
                          axis=1, keepdims=True)) + row_max
    ce_row = (lse - gathered).reshape(1, TP)                               # (1, TP)

    acc_c_ref[...] += ce_row * posf_row
    acc_p_ref[...] += posf_row

    # ---- mining score, lane-dense: positives and padded priors zeroed.
    gp = lax.broadcasted_iota(jnp.int32, (1, TP), 1) + pt * TP
    cmask = jnp.where(pos_row | (gp >= num_real_priors), 0.0, ce_row)      # (1, TP)
    rows = lax.broadcasted_iota(jnp.int32, c_ref.shape, 1)                 # (1,NPT,TP)
    c_ref[...] = jnp.where(rows == pt, cmask.reshape(1, 1, TP), c_ref[...])

    # ---- epilogue: one cross-lane reduction per batch element.
    @pl.when(pt == npt - 1)
    def _fin():
        lane8 = lax.broadcasted_iota(jnp.int32, (1, 1, 8), 2)
        stats_ref[...] = (jnp.where(lane8 == 0, jnp.sum(acc_l_ref[...]), 0.0)
                          + jnp.where(lane8 == 1, jnp.sum(acc_c_ref[...]), 0.0)
                          + jnp.where(lane8 == 2, jnp.sum(acc_p_ref[...]), 0.0))


# ----------------------------------------------------------------------------
# Wrapper
# ----------------------------------------------------------------------------
def _round_up(x, m):
    return ((x + m - 1) // m) * m


def _plan_prior_tiling(P):
    """Pad the prior axis and pick a tile (real SSD P=8732 is not 8-divisible).
    Tiles are capped at 512 to fit v5e's 16 MiB scoped VMEM and v7x's 64 MiB
    physical VMEM with double-buffering."""
    if P <= 512:
        p_pad = _round_up(P, 8)
        return p_pad, p_pad
    p_pad = _round_up(P, 512)
    return p_pad, 512


def multibox_loss(loc_data, conf_data, priors, targets,
                  *, num_classes, overlap_thresh, neg_pos):
    """loc_data (B,P,4), conf_data (B,P,C) in any float dtype (bf16 ok),
    priors (P,4) center form, targets (B,O,5) = [xmin,ymin,xmax,ymax,label]."""
    B, P, _ = loc_data.shape
    C = num_classes
    O = targets.shape[1]

    P_pad, TP = _plan_prior_tiling(P)
    NPT = P_pad // TP
    pad = P_pad - P

    # predictions stay in their native dtype (upcast happens inside the kernel)
    loc_data = jnp.pad(loc_data, ((0, 0), (0, pad), (0, 0)))
    conf_data = jnp.pad(conf_data, ((0, 0), (0, pad), (0, 0)))

    truths = targets[:, :, :4].astype(jnp.float32)        # (B, O, 4)
    labels = targets[:, :, 4:5].astype(jnp.float32)       # (B, O, 1)

    # point-form priors + areas, channel-major (P on lanes).  Zero padding makes
    # the padded priors inert (zero IoU with every GT box).
    pri = jnp.pad(priors[:P].astype(jnp.float32), ((0, pad), (0, 0)))
    cx, cy, w, h = pri[:, 0], pri[:, 1], pri[:, 2], pri[:, 3]
    x1, y1 = cx - 0.5 * w, cy - 0.5 * h
    x2, y2 = cx + 0.5 * w, cy + 0.5 * h
    area = (x2 - x1) * (y2 - y1)
    priors_cm = jnp.stack([cx, cy, w, h, x1, y1, x2, y2, area], axis=0)  # (9,P_pad)

    loc_t_cm, conf_t_cm = pl.pallas_call(
        functools.partial(match_kernel, threshold=float(overlap_thresh),
                          num_objs=O),
        grid=(B, 2, NPT),
        in_specs=[
            pl.BlockSpec((1, O, 4), lambda b, ph, t: (b, 0, 0)),
            pl.BlockSpec((1, O, 1), lambda b, ph, t: (b, 0, 0)),
            pl.BlockSpec((9, TP), lambda b, ph, t: (0, t)),
        ],
        out_specs=[
            pl.BlockSpec((1, 4, TP), lambda b, ph, t: (b, 0, t * ph)),
            pl.BlockSpec((1, 1, TP), lambda b, ph, t: (b, 0, t * ph)),
        ],
        out_shape=[
            jax.ShapeDtypeStruct((B, 4, P_pad), jnp.float32),
            jax.ShapeDtypeStruct((B, 1, P_pad), jnp.float32),
        ],
        scratch_shapes=[
            pltpu.VMEM((O, 1), jnp.float32),   # running best-prior overlap per GT
            pltpu.VMEM((O, 1), jnp.int32),     # running best-prior index per GT
        ],
        compiler_params=pltpu.CompilerParams(
            dimension_semantics=("parallel", "arbitrary", "arbitrary"),
            vmem_limit_bytes=32 * 1024 * 1024),
    )(truths, labels, priors_cm)

    stats, c_scores = pl.pallas_call(
        functools.partial(loss_kernel, num_real_priors=P),
        grid=(B, NPT),
        in_specs=[
            pl.BlockSpec((1, TP, 4), lambda b, t: (b, t, 0)),
            pl.BlockSpec((1, TP, C), lambda b, t: (b, t, 0)),
            pl.BlockSpec((1, 4, TP), lambda b, t: (b, 0, t)),
            pl.BlockSpec((1, 1, TP), lambda b, t: (b, 0, t)),
        ],
        out_specs=[
            pl.BlockSpec((1, 1, 8), lambda b, t: (b, 0, 0)),
            pl.BlockSpec((1, NPT, TP), lambda b, t: (b, 0, 0)),
        ],
        out_shape=[
            jax.ShapeDtypeStruct((B, 1, 8), jnp.float32),      # [loss_l, ce_pos, n_pos]
            jax.ShapeDtypeStruct((B, NPT, TP), jnp.float32),   # mining scores
        ],
        scratch_shapes=[
            pltpu.VMEM((4, TP), jnp.float32),   # smooth-L1 partials
            pltpu.VMEM((1, TP), jnp.float32),   # positive CE partials
            pltpu.VMEM((1, TP), jnp.float32),   # positive-count partials
        ],
        compiler_params=pltpu.CompilerParams(
            dimension_semantics=("parallel", "arbitrary"),
            vmem_limit_bytes=32 * 1024 * 1024),
    )(loc_data, conf_data, loc_t_cm, conf_t_cm)

    loss_l_b = stats[:, 0, 0]
    loss_c_pos_b = stats[:, 0, 1]
    num_pos = stats[:, 0, 2]

    # ---- hard-negative selection (wrapper side, O(P log P)):
    # sum of the num_neg largest mining scores.  Tied scores carry identical
    # cross-entropy, so this equals the torch sort-rank selection exactly;
    # padded priors carry score 0 and behave like the zeroed positives.
    c = c_scores.reshape(B, P_pad)
    num_neg = jnp.minimum((neg_pos * num_pos).astype(jnp.int32), P - 1)
    c_desc = -jnp.sort(-c, axis=1)
    csum = jnp.cumsum(c_desc, axis=1)
    gather_idx = jnp.clip(num_neg - 1, 0, P_pad - 1)[:, None]
    top_sum = jnp.take_along_axis(csum, gather_idx, axis=1)[:, 0]
    top_sum = jnp.where(num_neg > 0, top_sum, 0.0)

    loss_l = jnp.sum(loss_l_b)
    loss_c = jnp.sum(loss_c_pos_b + top_sum)
    N = jnp.maximum(jnp.sum(num_pos), 1.0)    # guard: zero positives in batch
    return loss_l / N, loss_c / N


# ----------------------------------------------------------------------------
# Pure-numpy reference mirroring the PyTorch forward (sanity check)
# ----------------------------------------------------------------------------
def ref_multibox_loss(loc_data, conf_data, priors, targets,
                      num_classes, threshold, negpos):
    loc_data = np.asarray(loc_data, np.float32)
    conf_data = np.asarray(conf_data, np.float32)
    pri = np.asarray(priors, np.float32)
    targets = np.asarray(targets, np.float32)
    B, P, _ = loc_data.shape
    point = np.concatenate([pri[:, :2] - pri[:, 2:] / 2,
                            pri[:, :2] + pri[:, 2:] / 2], axis=1)
    loc_t = np.zeros((B, P, 4), np.float32)
    conf_t = np.zeros((B, P), np.float32)
    for b in range(B):
        truths = targets[b, :, :4]
        labels = targets[b, :, 4]
        O = truths.shape[0]
        ix1 = np.maximum(truths[:, None, 0], point[None, :, 0])
        iy1 = np.maximum(truths[:, None, 1], point[None, :, 1])
        ix2 = np.minimum(truths[:, None, 2], point[None, :, 2])
        iy2 = np.minimum(truths[:, None, 3], point[None, :, 3])
        inter = np.clip(ix2 - ix1, 0, None) * np.clip(iy2 - iy1, 0, None)
        at = (truths[:, 2] - truths[:, 0]) * (truths[:, 3] - truths[:, 1])
        ap = (point[:, 2] - point[:, 0]) * (point[:, 3] - point[:, 1])
        ov = inter / (at[:, None] + ap[None, :] - inter)
        bpi = ov.argmax(1)
        bto = ov.max(0)
        bti = ov.argmax(0)
        bto[bpi] = 2.0
        for j in range(O):
            bti[bpi[j]] = j
        matched = truths[bti]
        conf = labels[bti] + 1.0
        conf[bto < threshold] = 0.0
        g_cxcy = ((matched[:, :2] + matched[:, 2:]) / 2 - pri[:, :2]) / (0.1 * pri[:, 2:])
        g_wh = np.log((matched[:, 2:] - matched[:, :2]) / pri[:, 2:]) / 0.2
        loc_t[b] = np.concatenate([g_cxcy, g_wh], axis=1)
        conf_t[b] = conf
    pos = conf_t > 0
    d = loc_data - loc_t
    sl = np.where(np.abs(d) < 1, 0.5 * d * d, np.abs(d) - 0.5)
    loss_l = float((sl * pos[..., None]).sum())
    bc = conf_data.reshape(-1, num_classes)
    gmax = bc.max()
    lse = np.log(np.exp(bc - gmax).sum(1)) + gmax
    gathered = bc[np.arange(bc.shape[0]), conf_t.reshape(-1).astype(np.int64)]
    lc = lse - gathered
    lc[pos.reshape(-1)] = 0.0
    lc = lc.reshape(B, P)
    loss_idx = np.argsort(-lc, axis=1, kind="stable")
    idx_rank = np.argsort(loss_idx, axis=1, kind="stable")
    num_pos = pos.sum(1, keepdims=True)
    num_neg = np.clip(negpos * num_pos, None, P - 1)
    neg = idx_rank < num_neg
    sel = (pos | neg).reshape(-1)
    rowmax = bc.max(1)
    lse_r = np.log(np.exp(bc - rowmax[:, None]).sum(1)) + rowmax
    ce = lse_r - gathered
    loss_c = float(ce[sel].sum())
    N = float(num_pos.sum())
    return loss_l / N, loss_c / N


if __name__ == "__main__":
    # batch, num_priors (exercises padding 700->1024 and 2 tiles of 512),
    # num_classes, num_objs
    B, P, C, O = 2, 700, 12, 8
    overlap_thresh, neg_pos = 0.5, 3

    key = jax.random.PRNGKey(0)
    k1, k2, k3, k4, k5, k6, k7 = jax.random.split(key, 7)

    # predictions streamed in bf16 (the kernels upcast in-VMEM)
    loc_data = (0.1 * jax.random.normal(k1, (B, P, 4), jnp.float32)).astype(jnp.bfloat16)
    conf_data = jax.random.normal(k2, (B, P, C), jnp.float32).astype(jnp.bfloat16)

    # priors in center-size form (cx, cy, w, h) inside the unit square
    cxcy = jax.random.uniform(k3, (P, 2), jnp.float32, 0.15, 0.85)
    wh = jax.random.uniform(k4, (P, 2), jnp.float32, 0.10, 0.30)
    priors = jnp.concatenate([cxcy, wh], axis=1)

    # GT targets: corner-form boxes + 0-indexed class label (background added by +1)
    t_c = jax.random.uniform(k5, (B, O, 2), jnp.float32, 0.25, 0.75)
    t_wh = jax.random.uniform(k6, (B, O, 2), jnp.float32, 0.15, 0.40)
    boxes = jnp.concatenate([t_c - t_wh / 2, t_c + t_wh / 2], axis=-1)
    tlabels = jax.random.randint(k7, (B, O, 1), 0, C - 1).astype(jnp.float32)
    targets = jnp.concatenate([boxes, tlabels], axis=-1)      # (B, O, 5)

    loss_l, loss_c = multibox_loss(
        loc_data, conf_data, priors, targets,
        num_classes=C, overlap_thresh=overlap_thresh, neg_pos=neg_pos)
    jax.block_until_ready((loss_l, loss_c))

    ref_l, ref_c = ref_multibox_loss(
        np.asarray(loc_data.astype(jnp.float32)),
        np.asarray(conf_data.astype(jnp.float32)),
        np.asarray(priors), np.asarray(targets),
        C, overlap_thresh, neg_pos)

    ok_l = abs(float(loss_l) - ref_l) <= 1e-2 + 2e-2 * abs(ref_l)
    ok_c = abs(float(loss_c) - ref_c) <= 1e-2 + 2e-2 * abs(ref_c)
    if not (ok_l and ok_c):
        raise AssertionError(
            f"mismatch: kernel=({float(loss_l)}, {float(loss_c)}) "
            f"ref=({ref_l}, {ref_c})")
    print("KERNEL_OK")
</pallas_src>

<mosaic_0001>
module attributes {stable_mosaic.version = 11 : i64} {
  func.func @match_kernel(%arg0: i32, %arg1: i32, %arg2: i32, %arg3: memref<1x8x4xf32, #tpu.memory_space<vmem>>, %arg4: memref<1x8x1xf32, #tpu.memory_space<vmem>>, %arg5: memref<9x512xf32, #tpu.memory_space<vmem>>, %arg6: memref<1x4x512xf32, #tpu.memory_space<vmem>>, %arg7: memref<1x1x512xf32, #tpu.memory_space<vmem>>, %arg8: memref<8x1xf32, #tpu.memory_space<vmem>>, %arg9: memref<8x1xi32, #tpu.memory_space<vmem>>) attributes {dimension_semantics = [#tpu.dimension_semantics<parallel>, #tpu.dimension_semantics<arbitrary>, #tpu.dimension_semantics<arbitrary>], iteration_bounds = array<i64: 2, 2, 2>, scalar_prefetch = 0 : i64, scratch_operands = 2 : i64, tpu.core_type = #tpu.core_type<tc>, window_params = [{transform_indices = @transform_0, window_bounds = array<i64: 1, 8, 4>}, {transform_indices = @transform_1, window_bounds = array<i64: 1, 8, 1>}, {transform_indices = @transform_2, window_bounds = array<i64: 9, 512>}, {transform_indices = @transform_3, window_bounds = array<i64: 1, 4, 512>}, {transform_indices = @transform_4, window_bounds = array<i64: 1, 1, 512>}]} {
    %c0 = arith.constant 0 : index
    %c0_0 = arith.constant 0 : index
    %c0_1 = arith.constant 0 : index
    %0 = vector.load %arg3[%c0, %c0_0, %c0_1] : memref<1x8x4xf32, #tpu.memory_space<vmem>>, vector<1x8x4xf32>
    %1 = vector.shape_cast %0 : vector<1x8x4xf32> to vector<8x4xf32>
    %c0_2 = arith.constant 0 : index
    %c0_3 = arith.constant 0 : index
    %2 = vector.load %arg5[%c0_2, %c0_3] : memref<9x512xf32, #tpu.memory_space<vmem>>, vector<9x512xf32>
    %3 = vector.extract_strided_slice %2 {offsets = [4, 0], sizes = [1, 512], strides = [1, 1]} : vector<9x512xf32> to vector<1x512xf32>
    %4 = vector.extract_strided_slice %2 {offsets = [5, 0], sizes = [1, 512], strides = [1, 1]} : vector<9x512xf32> to vector<1x512xf32>
    %5 = vector.extract_strided_slice %2 {offsets = [6, 0], sizes = [1, 512], strides = [1, 1]} : vector<9x512xf32> to vector<1x512xf32>
    %6 = vector.extract_strided_slice %2 {offsets = [7, 0], sizes = [1, 512], strides = [1, 1]} : vector<9x512xf32> to vector<1x512xf32>
    %7 = vector.extract_strided_slice %2 {offsets = [8, 0], sizes = [1, 512], strides = [1, 1]} : vector<9x512xf32> to vector<1x512xf32>
    %8 = vector.extract_strided_slice %1 {offsets = [0, 0], sizes = [8, 1], strides = [1, 1]} : vector<8x4xf32> to vector<8x1xf32>
    %9 = vector.extract_strided_slice %1 {offsets = [0, 1], sizes = [8, 1], strides = [1, 1]} : vector<8x4xf32> to vector<8x1xf32>
    %10 = vector.extract_strided_slice %1 {offsets = [0, 2], sizes = [8, 1], strides = [1, 1]} : vector<8x4xf32> to vector<8x1xf32>
    %11 = vector.extract_strided_slice %1 {offsets = [0, 3], sizes = [8, 1], strides = [1, 1]} : vector<8x4xf32> to vector<8x1xf32>
    %12 = vector.broadcast %10 : vector<8x1xf32> to vector<8x512xf32>
    %13 = vector.broadcast %5 : vector<1x512xf32> to vector<8x512xf32>
    %14 = arith.minimumf %12, %13 : vector<8x512xf32>
    %15 = vector.broadcast %8 : vector<8x1xf32> to vector<8x512xf32>
    %16 = vector.broadcast %3 : vector<1x512xf32> to vector<8x512xf32>
    %17 = arith.maximumf %15, %16 : vector<8x512xf32>
    %18 = arith.subf %14, %17 : vector<8x512xf32>
    %cst = arith.constant 0.000000e+00 : f32
    %19 = vector.broadcast %cst : f32 to vector<8x512xf32>
    %20 = arith.maximumf %18, %19 : vector<8x512xf32>
    %21 = vector.broadcast %11 : vector<8x1xf32> to vector<8x512xf32>
    %22 = vector.broadcast %6 : vector<1x512xf32> to vector<8x512xf32>
    %23 = arith.minimumf %21, %22 : vector<8x512xf32>
    %24 = vector.broadcast %9 : vector<8x1xf32> to vector<8x512xf32>
    %25 = vector.broadcast %4 : vector<1x512xf32> to vector<8x512xf32>
    %26 = arith.maximumf %24, %25 : vector<8x512xf32>
    %27 = arith.subf %23, %26 : vector<8x512xf32>
    %cst_4 = arith.constant 0.000000e+00 : f32
    %28 = vector.broadcast %cst_4 : f32 to vector<8x512xf32>
    %29 = arith.maximumf %27, %28 : vector<8x512xf32>
    %30 = arith.mulf %20, %29 : vector<8x512xf32>
    %31 = arith.subf %10, %8 : vector<8x1xf32>
    %32 = arith.subf %11, %9 : vector<8x1xf32>
    %33 = arith.mulf %31, %32 : vector<8x1xf32>
    %34 = vector.broadcast %33 : vector<8x1xf32> to vector<8x512xf32>
    %35 = vector.broadcast %7 : vector<1x512xf32> to vector<8x512xf32>
    %36 = arith.addf %34, %35 : vector<8x512xf32>
    %37 = arith.subf %36, %30 : vector<8x512xf32>
    %cst_5 = arith.constant 9.99999996E-13 : f32
    %38 = vector.broadcast %cst_5 : f32 to vector<8x512xf32>
    %39 = arith.addf %37, %38 : vector<8x512xf32>
    %40 = arith.divf %30, %39 : vector<8x512xf32>
    %41 = tpu.iota {dimensions = array<i32: 0>} : vector<8x512xi32>
    %42 = tpu.iota {dimensions = array<i32: 1>} : vector<8x512xi32>
    %c512_i32 = arith.constant 512 : i32
    %43 = arith.muli %arg2, %c512_i32 : i32
    %44 = vector.broadcast %43 : i32 to vector<8x512xi32>
    %45 = arith.addi %42, %44 : vector<8x512xi32>
    %c0_i32 = arith.constant 0 : i32
    %46 = arith.cmpi eq, %arg1, %c0_i32 : i32
    %47 = arith.extui %46 : i1 to i32
    %c0_i32_6 = arith.constant 0 : i32
    %48 = arith.cmpi ne, %47, %c0_i32_6 : i32
    scf.if %48 {
      %c0_i32_8 = arith.constant 0 : i32
      %52 = arith.cmpi eq, %arg2, %c0_i32_8 : i32
      %53 = arith.extui %52 : i1 to i32
      %c0_i32_9 = arith.constant 0 : i32
      %54 = arith.cmpi ne, %53, %c0_i32_9 : i32
      scf.if %54 {
        %cst_22 = arith.constant -1.000000e+00 : f32
        %71 = vector.broadcast %cst_22 : f32 to vector<8x1xf32>
        %c0_23 = arith.constant 0 : index
        %c0_24 = arith.constant 0 : index
        %72 = vector.load %arg8[%c0_23, %c0_24] : memref<8x1xf32, #tpu.memory_space<vmem>>, vector<8x1xf32>
        tpu.vector_store %arg8[%c0_23, %c0_24], %71 {strides = array<i32>} : memref<8x1xf32, #tpu.memory_space<vmem>>, vector<8x1xf32>,
        %c0_i32_25 = arith.constant 0 : i32
        %73 = vector.broadcast %c0_i32_25 : i32 to vector<8x1xi32>
        %c0_26 = arith.constant 0 : index
        %c0_27 = arith.constant 0 : index
        %74 = vector.load %arg9[%c0_26, %c0_27] : memref<8x1xi32, #tpu.memory_space<vmem>>, vector<8x1xi32>
        tpu.vector_store %arg9[%c0_26, %c0_27], %73 {strides = array<i32>} : memref<8x1xi32, #tpu.memory_space<vmem>>, vector<8x1xi32>,
      } else {
      }
      %cst_10 = arith.constant dense<0xFF800000> : vector<8xf32>
      %55 = vector.multi_reduction <maximumf>, %40, %cst_10 [1] : vector<8x512xf32> to vector<8xf32>
      %56 = vector.shape_cast %55 : vector<8xf32> to vector<8x1xf32>
      %57 = vector.broadcast %56 : vector<8x1xf32> to vector<8x512xf32>
      %58 = arith.cmpf oge, %40, %57 : vector<8x512xf32>
      %c2147483647_i32 = arith.constant 2147483647 : i32
      %59 = vector.broadcast %c2147483647_i32 : i32 to vector<8x512xi32>
      %60 = arith.select %58, %45, %59 : vector<8x512xi1>, vector<8x512xi32>
      %cst_11 = arith.constant dense<2147483647> : vector<8xi32>
      %61 = vector.multi_reduction <minsi>, %60, %cst_11 [1] : vector<8x512xi32> to vector<8xi32>
      %62 = vector.shape_cast %61 : vector<8xi32> to vector<8x1xi32>
      %c0_12 = arith.constant 0 : index
      %c0_13 = arith.constant 0 : index
      %63 = vector.load %arg8[%c0_12, %c0_13] : memref<8x1xf32, #tpu.memory_space<vmem>>, vector<8x1xf32>
      %64 = arith.cmpf ogt, %56, %63 : vector<8x1xf32>
      %c0_14 = arith.constant 0 : index
      %c0_15 = arith.constant 0 : index
      %65 = vector.load %arg9[%c0_14, %c0_15] : memref<8x1xi32, #tpu.memory_space<vmem>>, vector<8x1xi32>
      %66 = arith.select %64, %62, %65 : vector<8x1xi1>, vector<8x1xi32>
      %c0_16 = arith.constant 0 : index
      %c0_17 = arith.constant 0 : index
      %67 = vector.load %arg9[%c0_16, %c0_17] : memref<8x1xi32, #tpu.memory_space<vmem>>, vector<8x1xi32>
      tpu.vector_store %arg9[%c0_16, %c0_17], %66 {strides = array<i32>} : memref<8x1xi32, #tpu.memory_space<vmem>>, vector<8x1xi32>,
      %c0_18 = arith.constant 0 : index
      %c0_19 = arith.constant 0 : index
      %68 = vector.load %arg8[%c0_18, %c0_19] : memref<8x1xf32, #tpu.memory_space<vmem>>, vector<8x1xf32>
      %69 = arith.select %64, %56, %68 : vector<8x1xi1>, vector<8x1xf32>
      %c0_20 = arith.constant 0 : index
      %c0_21 = arith.constant 0 : index
      %70 = vector.load %arg8[%c0_20, %c0_21] : memref<8x1xf32, #tpu.memory_space<vmem>>, vector<8x1xf32>
      tpu.vector_store %arg8[%c0_20, %c0_21], %69 {strides = array<i32>} : memref<8x1xf32, #tpu.memory_space<vmem>>, vector<8x1xf32>,
    } else {
    }
    %c1_i32 = arith.constant 1 : i32
    %49 = arith.cmpi eq, %arg1, %c1_i32 : i32
    %50 = arith.extui %49 : i1 to i32
    %c0_i32_7 = arith.constant 0 : i32
    %51 = arith.cmpi ne, %50, %c0_i32_7 : i32
    scf.if %51 {
      %c0_8 = arith.constant 0 : index
      %c0_9 = arith.constant 0 : index
      %c0_10 = arith.constant 0 : index
      %52 = vector.load %arg4[%c0_8, %c0_9, %c0_10] : memref<1x8x1xf32, #tpu.memory_space<vmem>>, vector<1x8x1xf32>
      %53 = vector.shape_cast %52 : vector<1x8x1xf32> to vector<8x1xf32>
      %cst_11 = arith.constant dense<0xFF800000> : vector<512xf32>
      %54 = vector.multi_reduction <maximumf>, %40, %cst_11 [0] : vector<8x512xf32> to vector<512xf32>
      %55 = vector.shape_cast %54 : vector<512xf32> to vector<1x512xf32>
      %56 = vector.broadcast %55 : vector<1x512xf32> to vector<8x512xf32>
      %57 = arith.cmpf oge, %40, %56 : vector<8x512xf32>
      %c8_i32 = arith.constant 8 : i32
      %58 = vector.broadcast %c8_i32 : i32 to vector<8x512xi32>
      %59 = arith.select %57, %41, %58 : vector<8x512xi1>, vector<8x512xi32>
      %cst_12 = arith.constant dense<2147483647> : vector<512xi32>
      %60 = vector.multi_reduction <minsi>, %59, %cst_12 [0] : vector<8x512xi32> to vector<512xi32>
      %61 = vector.shape_cast %60 : vector<512xi32> to vector<1x512xi32>
      %c0_13 = arith.constant 0 : index
      %c0_14 = arith.constant 0 : index
      %62 = vector.load %arg9[%c0_13, %c0_14] : memref<8x1xi32, #tpu.memory_space<vmem>>, vector<8x1xi32>
      %63 = vector.broadcast %62 : vector<8x1xi32> to vector<8x512xi32>
      %64 = arith.cmpi eq, %45, %63 : vector<8x512xi32>
      %c-1_i32 = arith.constant -1 : i32
      %65 = vector.broadcast %c-1_i32 : i32 to vector<8x512xi32>
      %66 = arith.select %64, %41, %65 : vector<8x512xi1>, vector<8x512xi32>
      %cst_15 = arith.constant dense<-2147483648> : vector<512xi32>
      %67 = vector.multi_reduction <maxsi>, %66, %cst_15 [0] : vector<8x512xi32> to vector<512xi32>
      %68 = vector.shape_cast %67 : vector<512xi32> to vector<1x512xi32>
      %c0_i32_16 = arith.constant 0 : i32
      %69 = vector.broadcast %c0_i32_16 : i32 to vector<1x512xi32>
      %70 = arith.cmpi sge, %68, %69 : vector<1x512xi32>
      %71 = arith.select %70, %68, %61 : vector<1x512xi1>, vector<1x512xi32>
      %cst_17 = arith.constant 2.000000e+00 : f32
      %72 = vector.broadcast %cst_17 : f32 to vector<1x512xf32>
      %73 = arith.select %70, %72, %55 : vector<1x512xi1>, vector<1x512xf32>
      %74 = vector.broadcast %71 : vector<1x512xi32> to vector<8x512xi32>
      %75 = arith.cmpi eq, %41, %74 : vector<8x512xi32>
      %76 = arith.extui %75 : vector<8x512xi1> to vector<8x512xi32>
      %77 = arith.sitofp %76 : vector<8x512xi32> to vector<8x512xf32>
      %cst_18 = arith.constant 0.000000e+00 : f32
      %78 = vector.broadcast %cst_18 : f32 to vector<8x3xf32>
      %79 = tpu.concatenate %1, %53, %78 in 1 : vector<8x4xf32>, vector<8x1xf32>, vector<8x3xf32> -> vector<8x8xf32>
      %80 = tpu.transpose %79, [1, 0] : vector<8x8xf32> -> vector<8x8xf32>
      %cst_19 = arith.constant dense<0.000000e+00> : vector<8x512xf32>
      %81 = tpu.matmul %80, %77, %cst_19 {dimension_numbers = #tpu.dot_dimension_numbers<[1], [0], [0], [1], [0, 0, 1, 1], [], []>, precision = #tpu.contract_precision<fp32>} : vector<8x8xf32>, vector<8x512xf32>, vector<8x512xf32> -> vector<8x512xf32>
      %82 = vector.extract_strided_slice %81 {offsets = [0, 0], sizes = [1, 512], strides = [1, 1]} : vector<8x512xf32> to vector<1x512xf32>
      %83 = vector.extract_strided_slice %81 {offsets = [1, 0], sizes = [1, 512], strides = [1, 1]} : vector<8x512xf32> to vector<1x512xf32>
      %84 = vector.extract_strided_slice %81 {offsets = [2, 0], sizes = [1, 512], strides = [1, 1]} : vector<8x512xf32> to vector<1x512xf32>
      %85 = vector.extract_strided_slice %81 {offsets = [3, 0], sizes = [1, 512], strides = [1, 1]} : vector<8x512xf32> to vector<1x512xf32>
      %86 = vector.extract_strided_slice %81 {offsets = [4, 0], sizes = [1, 512], strides = [1, 1]} : vector<8x512xf32> to vector<1x512xf32>
      %cst_20 = arith.constant 5.000000e-01 : f32
      %87 = vector.broadcast %cst_20 : f32 to vector<1x512xf32>
      %88 = arith.cmpf olt, %73, %87 : vector<1x512xf32>
      %cst_21 = arith.constant 1.000000e+00 : f32
      %89 = vector.broadcast %cst_21 : f32 to vector<1x512xf32>
      %90 = arith.addf %86, %89 : vector<1x512xf32>
      %cst_22 = arith.constant 0.000000e+00 : f32
      %91 = vector.broadcast %cst_22 : f32 to vector<1x512xf32>
      %92 = arith.select %88, %91, %90 : vector<1x512xi1>, vector<1x512xf32>
      %c0_23 = arith.constant 0 : index
      %c0_24 = arith.constant 0 : index
      %c0_25 = arith.constant 0 : index
      %93 = vector.load %arg7[%c0_23, %c0_24, %c0_25] : memref<1x1x512xf32, #tpu.memory_space<vmem>>, vector<1x1x512xf32>
      %94 = vector.shape_cast %93 : vector<1x1x512xf32> to vector<1x512xf32>
      %95 = vector.shape_cast %92 : vector<1x512xf32> to vector<1x1x512xf32>
      tpu.vector_store %arg7[%c0_23, %c0_24, %c0_25], %95 {strides = array<i32>} : memref<1x1x512xf32, #tpu.memory_space<vmem>>, vector<1x1x512xf32>,
      %96 = vector.extract_strided_slice %2 {offsets = [0, 0], sizes = [1, 512], strides = [1, 1]} : vector<9x512xf32> to vector<1x512xf32>
      %97 = vector.extract_strided_slice %2 {offsets = [1, 0], sizes = [1, 512], strides = [1, 1]} : vector<9x512xf32> to vector<1x512xf32>
      %98 = vector.extract_strided_slice %2 {offsets = [2, 0], sizes = [1, 512], strides = [1, 1]} : vector<9x512xf32> to vector<1x512xf32>
      %cst_26 = arith.constant 9.99999996E-13 : f32
      %99 = vector.broadcast %cst_26 : f32 to vector<1x512xf32>
      %100 = arith.maximumf %98, %99 : vector<1x512xf32>
      %101 = vector.extract_strided_slice %2 {offsets = [3, 0], sizes = [1, 512], strides = [1, 1]} : vector<9x512xf32> to vector<1x512xf32>
      %cst_27 = arith.constant 9.99999996E-13 : f32
      %102 = vector.broadcast %cst_27 : f32 to vector<1x512xf32>
      %103 = arith.maximumf %101, %102 : vector<1x512xf32>
      %104 = arith.addf %82, %84 : vector<1x512xf32>
      %cst_28 = arith.constant 5.000000e-01 : f32
      %105 = vector.broadcast %cst_28 : f32 to vector<1x512xf32>
      %106 = arith.mulf %104, %105 : vector<1x512xf32>
      %107 = arith.subf %106, %96 : vector<1x512xf32>
      %cst_29 = arith.constant 1.000000e-01 : f32
      %108 = vector.broadcast %cst_29 : f32 to vector<1x512xf32>
      %109 = arith.mulf %108, %100 : vector<1x512xf32>
      %110 = arith.divf %107, %109 : vector<1x512xf32>
      %c0_30 = arith.constant 0 : index
      %c0_31 = arith.constant 0 : index
      %c0_32 = arith.constant 0 : index
      %111 = vector.load %arg6[%c0_30, %c0_31, %c0_32] : memref<1x4x512xf32, #tpu.memory_space<vmem>>, vector<1x1x512xf32>
      %112 = vector.shape_cast %111 : vector<1x1x512xf32> to vector<1x512xf32>
      %113 = vector.shape_cast %110 : vector<1x512xf32> to vector<1x1x512xf32>
      tpu.vector_store %arg6[%c0_30, %c0_31, %c0_32], %113 {strides = array<i32>} : memref<1x4x512xf32, #tpu.memory_space<vmem>>, vector<1x1x512xf32>,
      %114 = arith.addf %83, %85 : vector<1x512xf32>
      %cst_33 = arith.constant 5.000000e-01 : f32
      %115 = vector.broadcast %cst_33 : f32 to vector<1x512xf32>
      %116 = arith.mulf %114, %115 : vector<1x512xf32>
      %117 = arith.subf %116, %97 : vector<1x512xf32>
      %cst_34 = arith.constant 1.000000e-01 : f32
      %118 = vector.broadcast %cst_34 : f32 to vector<1x512xf32>
      %119 = arith.mulf %118, %103 : vector<1x512xf32>
      %120 = arith.divf %117, %119 : vector<1x512xf32>
      %c0_35 = arith.constant 0 : index
      %c1 = arith.constant 1 : index
      %c0_36 = arith.constant 0 : index
      %121 = vector.load %arg6[%c0_35, %c1, %c0_36] : memref<1x4x512xf32, #tpu.memory_space<vmem>>, vector<1x1x512xf32>
      %122 = vector.shape_cast %121 : vector<1x1x512xf32> to vector<1x512xf32>
      %123 = vector.shape_cast %120 : vector<1x512xf32> to vector<1x1x512xf32>
      tpu.vector_store %arg6[%c0_35, %c1, %c0_36], %123 {strides = array<i32>} : memref<1x4x512xf32, #tpu.memory_space<vmem>>, vector<1x1x512xf32>,
      %124 = arith.subf %84, %82 : vector<1x512xf32>
      %cst_37 = arith.constant 9.99999996E-13 : f32
      %125 = vector.broadcast %cst_37 : f32 to vector<1x512xf32>
      %126 = arith.maximumf %124, %125 : vector<1x512xf32>
      %127 = arith.divf %126, %100 : vector<1x512xf32>
      %128 = math.log %127 : vector<1x512xf32>
      %cst_38 = arith.constant 2.000000e-01 : f32
      %129 = vector.broadcast %cst_38 : f32 to vector<1x512xf32>
      %130 = arith.divf %128, %129 : vector<1x512xf32>
      %c0_39 = arith.constant 0 : index
      %c2 = arith.constant 2 : index
      %c0_40 = arith.constant 0 : index
      %131 = vector.load %arg6[%c0_39, %c2, %c0_40] : memref<1x4x512xf32, #tpu.memory_space<vmem>>, vector<1x1x512xf32>
      %132 = vector.shape_cast %131 : vector<1x1x512xf32> to vector<1x512xf32>
      %133 = vector.shape_cast %130 : vector<1x512xf32> to vector<1x1x512xf32>
      tpu.vector_store %arg6[%c0_39, %c2, %c0_40], %133 {strides = array<i32>} : memref<1x4x512xf32, #tpu.memory_space<vmem>>, vector<1x1x512xf32>,
      %134 = arith.subf %85, %83 : vector<1x512xf32>
      %cst_41 = arith.constant 9.99999996E-13 : f32
      %135 = vector.broadcast %cst_41 : f32 to vector<1x512xf32>
      %136 = arith.maximumf %134, %135 : vector<1x512xf32>
      %137 = arith.divf %136, %103 : vector<1x512xf32>
      %138 = math.log %137 : vector<1x512xf32>
      %cst_42 = arith.constant 2.000000e-01 : f32
      %139 = vector.broadcast %cst_42 : f32 to vector<1x512xf32>
      %140 = arith.divf %138, %139 : vector<1x512xf32>
      %c0_43 = arith.constant 0 : index
      %c3 = arith.constant 3 : index
      %c0_44 = arith.constant 0 : index
      %141 = vector.load %arg6[%c0_43, %c3, %c0_44] : memref<1x4x512xf32, #tpu.memory_space<vmem>>, vector<1x1x512xf32>
      %142 = vector.shape_cast %141 : vector<1x1x512xf32> to vector<1x512xf32>
      %143 = vector.shape_cast %140 : vector<1x512xf32> to vector<1x1x512xf32>
      tpu.vector_store %arg6[%c0_43, %c3, %c0_44], %143 {strides = array<i32>} : memref<1x4x512xf32, #tpu.memory_space<vmem>>, vector<1x1x512xf32>,
    } else {
    }
    return
  }
  func.func @transform_0(%arg0: i32, %arg1: i32, %arg2: i32) -> (i32, i32, i32) {
    %c0_i32 = arith.constant 0 : i32
    %c0_i32_0 = arith.constant 0 : i32
    %c0_i32_1 = arith.constant 0 : i32
    return %arg0, %c0_i32, %c0_i32_0 : i32, i32, i32
  }
  func.func @transform_1(%arg0: i32, %arg1: i32, %arg2: i32) -> (i32, i32, i32) {
    %c0_i32 = arith.constant 0 : i32
    %c0_i32_0 = arith.constant 0 : i32
    %c0_i32_1 = arith.constant 0 : i32
    return %arg0, %c0_i32, %c0_i32_0 : i32, i32, i32
  }
  func.func @transform_2(%arg0: i32, %arg1: i32, %arg2: i32) -> (i32, i32) {
    %c0_i32 = arith.constant 0 : i32
    %c0_i32_0 = arith.constant 0 : i32
    return %c0_i32, %arg2 : i32, i32
  }
  func.func @transform_3(%arg0: i32, %arg1: i32, %arg2: i32) -> (i32, i32, i32) {
    %0 = arith.muli %arg2, %arg1 : i32
    %c0_i32 = arith.constant 0 : i32
    %c0_i32_0 = arith.constant 0 : i32
    return %arg0, %c0_i32, %0 : i32, i32, i32
  }
  func.func @transform_4(%arg0: i32, %arg1: i32, %arg2: i32) -> (i32, i32, i32) {
    %0 = arith.muli %arg2, %arg1 : i32
    %c0_i32 = arith.constant 0 : i32
    %c0_i32_0 = arith.constant 0 : i32
    return %arg0, %c0_i32, %0 : i32, i32, i32
  }
}

</mosaic_0001>

<llo_original>
// kernel: tpu_custom_call.1
$region0: #{tpu_custom_call.1}
  #allocation0 [shape = 'u32[]', space=smem, size = 0x4, offset = 0x4, fixed_abs, tag = 'smem constant byte address 0x4 - core index']
  #allocation1 [shape = 'u32[144,128]{1,0:T(1,128)}', space=vmem, size = 0x12000, scoped, tag = 'internal scratch']
  #allocation2 [shape = 'f32[8,1]{1,0:T(8,128)}', space=vmem, size = 0x1000, scoped, tag = 'scratch operand']
  #allocation3 [shape = 's32[8,1]{1,0:T(8,128)}', space=vmem, size = 0x1000, scoped, tag = 'scratch operand']
  %s0 = inlined_call_operand.vmem [shape: f32[2,8,4], index: 0, kind: input, shape index: {}]
  %s1 = inlined_call_operand.vmem [shape: f32[2,8,1], index: 1, kind: input, shape index: {}]
  %s2 = inlined_call_operand.hbm [shape: f32[9,1024], index: 2, kind: input, shape index: {}]
  %s3 = inlined_call_operand.hbm [shape: f32[2,4,1024], index: 3, kind: output, shape index: {0}]
  %s4 = inlined_call_operand.hbm [shape: f32[2,1,1024], index: 4, kind: output, shape index: {1}]
  %5 = xla_tuple %s3, %s4
  %s6 = sld [smem:[#allocation0]]
  $region69: #{tpu_custom_call.1} parent=0
    _
  %s8 = ssub.s32 1, %s6
  %s9 = scalar_select 0, %s8, %s6
  $region1: #{tpu_custom_call.1} parent=0
    #allocation4 [shape = 'u8[65536]{0}', space=vmem, size = 0x10000, scoped, tag = 'input window, operand 2']
    #allocation5 [shape = 's32[2]{0}', space=sflag, size = 0x8, scoped, tag = 'scoped memory for tpu_custom_call.1']
    #allocation6 [shape = 's32[2]{0}', space=sflag, size = 0x8, scoped, tag = 'scoped memory for tpu_custom_call.1']
    #allocation7 [shape = 'u8[16384]{0}', space=vmem, size = 0x4000, scoped, tag = 'output window, operand 0']
    #allocation8 [shape = 'u8[4096]{0}', space=vmem, size = 0x1000, scoped, tag = 'output window, operand 1']
    #allocation9 [shape = 's32[2]{0}', space=sflag, size = 0x8, scoped, tag = 'scoped memory for tpu_custom_call.1']
    %10 = vsyncpa [#allocation5], 0
    %s11 = scalar_lea.sflag [#allocation5], 1
    %12 = vsyncpa %s11, 0
    %13 = vsyncpa [#allocation6], 0
    %s14 = scalar_lea.sflag [#allocation6], 1
    %15 = vsyncpa %s14, 0
    %16 = vsyncpa [#allocation9], 0
    %s17 = scalar_lea.sflag [#allocation9], 1
    %18 = vsyncpa %s17, 0
    loop: start=0, step=1, limit=10
    $region2: #{tpu_custom_call.1} parent=1 // loop_pre_header
      _
    $region3: #{tpu_custom_call.1} parent=1 // loop_header
      %s20 = sphi 0, %s24
      %p21 = scmp.ge.s32.totalorder %s20, 10
      %s27 = sphi 0, %s46
      %s28 = sphi 0, %s42
      %s29 = sphi 0, %s38
      %s30 = sphi 0, %s27
      %s31 = sphi 0, %s28
      %s32 = sphi 0, %s29
      %s33 = sphi 0, %s30
      %s34 = sphi 0, %s31
      %s35 = sphi 0, %s32
      %s49 = sphi 0, %s51
      %s52 = sphi 0, %s49
      %s53 = sphi 0, %s52
      %s69 = sphi 0, %s53
      %s75 = sphi 0, %s77
      %s78 = sphi 0, %s75
      %s79 = sphi 0, %s78
      %s95 = sphi 0, %s79
      %s101 = sphi 0, %s103
      %s104 = sphi 0, %s101
      %s105 = sphi 0, %s104
      %s121 = sphi 0, %s105
      %s131 = sphi 0, %s133
      %s134 = sphi 0, %s131
      %s135 = sphi 0, %s134
      %s151 = sphi 0, %s135
      %s161 = sphi 0, %s163
      %s164 = sphi 0, %s161
      %s165 = sphi 0, %s164
      %s181 = sphi 0, %s165
    $region4: #{tpu_custom_call.1} parent=1 // loop_header_branch
      %23 = sbr.rel (%p21) target = $region8
    $region5: #{tpu_custom_call.1} parent=1 // loop_body
      %s25 = ssub.s32 %s20, 1
      %s26 = ssub.s32 %s20, 2
      %s36 = sadd.s32 1, %s29
      %p37 = scmp.ge.s32.totalorder %s36, 2
      %s38 = scalar_select %p37, 0, %s36
      %s39 = sadd.s32 1, %s28
      %s40 = scalar_select %p37, %s39, %s28
      %p41 = scmp.ge.s32.totalorder %s40, 2
      %s42 = scalar_select %p41, 0, %s40
      %s43 = sadd.s32 1, %s27
      %s44 = scalar_select %p41, %s43, %s27
      %p45 = scmp.ge.s32.totalorder %s44, 2
      %s46 = scalar_select %p45, 0, %s44
      %s47 = ssub.s32 %s27, %s46
      %p48 = scmp.eq.s32.totalorder %s47, 0
      %s50 = sadd.s32 %s49, 1
      %s51 = scalar_select %p48, %s49, %s50
      %p54 = pneg %p48
      %p55 = scmp.eq.s32.totalorder %s20, 7
      %p56 = por %p54, %p55
      %p57 = scmp.ne.s32.totalorder %s49, %s52
      %p58 = scmp.eq.s32.totalorder %s20, 0
      %p59 = por %p57, %p58
      %p60 = scmp.ne.s32.totalorder %s49, %s52
      %p61 = scmp.eq.s32.totalorder %s25, 7
      %p62 = por %p60, %p61
      %p63 = scmp.ne.s32.totalorder %s52, %s53
      %p64 = scmp.eq.s32.totalorder %s25, 0
      %p65 = por %p63, %p64
      %p66 = scmp.ne.s32.totalorder %s52, %s53
      %p67 = scmp.eq.s32.totalorder %s26, 7
      %p68 = por %p66, %p67
      %p70 = scmp.ne.s32.totalorder %s53, %s69
      %p71 = scmp.eq.s32.totalorder %s26, 0
      %p72 = por %p70, %p71
      %s73 = ssub.s32 %s27, %s46
      %p74 = scmp.eq.s32.totalorder %s73, 0
      %s76 = sadd.s32 %s75, 1
      %s77 = scalar_select %p74, %s75, %s76
      %p80 = pneg %p74
      %p81 = scmp.eq.s32.totalorder %s20, 7
      %p82 = por %p80, %p81
      %p83 = scmp.ne.s32.totalorder %s75, %s78
      %p84 = scmp.eq.s32.totalorder %s20, 0
      %p85 = por %p83, %p84
      %p86 = scmp.ne.s32.totalorder %s75, %s78
      %p87 = scmp.eq.s32.totalorder %s25, 7
      %p88 = por %p86, %p87
      %p89 = scmp.ne.s32.totalorder %s78, %s79
      %p90 = scmp.eq.s32.totalorder %s25, 0
      %p91 = por %p89, %p90
      %p92 = scmp.ne.s32.totalorder %s78, %s79
      %p93 = scmp.eq.s32.totalorder %s26, 7
      %p94 = por %p92, %p93
      %p96 = scmp.ne.s32.totalorder %s79, %s95
      %p97 = scmp.eq.s32.totalorder %s26, 0
      %p98 = por %p96, %p97
      %s99 = ssub.s32 %s29, %s38
      %p100 = scmp.eq.s32.totalorder %s99, 0
      %s102 = sadd.s32 %s101, 1
      %s103 = scalar_select %p100, %s101, %s102
      %p106 = pneg %p100
      %p107 = scmp.eq.s32.totalorder %s20, 7
      %p108 = por %p106, %p107
      %p109 = scmp.ne.s32.totalorder %s101, %s104
      %p110 = scmp.eq.s32.totalorder %s20, 0
      %p111 = por %p109, %p110
      %p112 = scmp.ne.s32.totalorder %s101, %s104
      %p113 = scmp.eq.s32.totalorder %s25, 7
      %p114 = por %p112, %p113
      %p115 = scmp.ne.s32.totalorder %s104, %s105
      %p116 = scmp.eq.s32.totalorder %s25, 0
      %p117 = por %p115, %p116
      %p118 = scmp.ne.s32.totalorder %s104, %s105
      %p119 = scmp.eq.s32.totalorder %s26, 7
      %p120 = por %p118, %p119
      %p122 = scmp.ne.s32.totalorder %s105, %s121
      %p123 = scmp.eq.s32.totalorder %s26, 0
      %p124 = por %p122, %p123
      %s125 = smul.u32 %s29, %s28
      %s126 = smul.u32 %s38, %s42
      %s127 = ssub.s32 %s27, %s46
      %s128 = ssub.s32 %s125, %s126
      %s129 = sor.u32 %s127, %s128
      %p130 = scmp.eq.s32.totalorder %s129, 0
      %s132 = sadd.s32 %s131, 1
      %s133 = scalar_select %p130, %s131, %s132
      %p136 = pneg %p130
      %p137 = scmp.eq.s32.totalorder %s20, 7
      %p138 = por %p136, %p137
      %p139 = scmp.ne.s32.totalorder %s131, %s134
      %p140 = scmp.eq.s32.totalorder %s20, 0
      %p141 = por %p139, %p140
      %p142 = scmp.ne.s32.totalorder %s131, %s134
      %p143 = scmp.eq.s32.totalorder %s25, 7
      %p144 = por %p142, %p143
      %p145 = scmp.ne.s32.totalorder %s134, %s135
      %p146 = scmp.eq.s32.totalorder %s25, 0
      %p147 = por %p145, %p146
      %p148 = scmp.ne.s32.totalorder %s134, %s135
      %p149 = scmp.eq.s32.totalorder %s26, 7
      %p150 = por %p148, %p149
      %p152 = scmp.ne.s32.totalorder %s135, %s151
      %p153 = scmp.eq.s32.totalorder %s26, 0
      %p154 = por %p152, %p153
      %s155 = smul.u32 %s29, %s28
      %s156 = smul.u32 %s38, %s42
      %s157 = ssub.s32 %s27, %s46
      %s158 = ssub.s32 %s155, %s156
      %s159 = sor.u32 %s157, %s158
      %p160 = scmp.eq.s32.totalorder %s159, 0
      %s162 = sadd.s32 %s161, 1
      %s163 = scalar_select %p160, %s161, %s162
      %p166 = pneg %p160
      %p167 = scmp.eq.s32.totalorder %s20, 7
      %p168 = por %p166, %p167
      %p169 = scmp.ne.s32.totalorder %s161, %s164
      %p170 = scmp.eq.s32.totalorder %s20, 0
      %p171 = por %p169, %p170
      %p172 = scmp.ne.s32.totalorder %s161, %s164
      %p173 = scmp.eq.s32.totalorder %s25, 7
      %p174 = por %p172, %p173
      %p175 = scmp.ne.s32.totalorder %s164, %s165
      %p176 = scmp.eq.s32.totalorder %s25, 0
      %p177 = por %p175, %p176
      %p178 = scmp.ne.s32.totalorder %s164, %s165
      %p179 = scmp.eq.s32.totalorder %s26, 7
      %p180 = por %p178, %p179
      %p182 = scmp.ne.s32.totalorder %s165, %s181
      %p183 = scmp.eq.s32.totalorder %s26, 0
      %p184 = por %p182, %p183
      %p185 = scmp.le.s32.totalorder 1, %s20
      %p186 = scmp.lt.s32.totalorder %s20, 9
      %p187 = pnand %p185, %p186
      %p188 = pneg %p187
      // Predicated region
      $region9: #{tpu_custom_call.1} parent=5 // pred_check
        _
      $region10: #{tpu_custom_call.1} parent=5 // pred_check_branch
        %190 = sbr.rel (%p187) target = $region12
      $region11: #{tpu_custom_call.1} parent=5 // pred_region
        %s191 = ssub.s32 %s20, 1
      $region12: #{tpu_custom_call.1} parent=5 // pred_fallthru
        _
      %p192 = scmp.lt.s32.totalorder %s20, 8
      // Predicated region
      $region13: #{tpu_custom_call.1} parent=5 // pred_check
        %p193 = pneg %p192
      $region14: #{tpu_custom_call.1} parent=5 // pred_check_branch
        %195 = sbr.rel (%p193) target = $region16
      $region15: #{tpu_custom_call.1} parent=5 // pred_region
        // Predicated region
        $region17: #{tpu_custom_call.1} parent=15 // pred_check
          %p196 = pneg %p59
        $region18: #{tpu_custom_call.1} parent=15 // pred_check_branch
          %198 = sbr.rel (%p196) target = $region20
        $region19: #{tpu_custom_call.1} parent=15 // pred_region
          %p199 = scmp.lt.s32.totalorder %s27, 1
          %s200 = scalar_select %p199, %s27, 1
          %s201 = smul.addr %s200, 8
          %s202 = scalar_lea.vmem %s0, %s201
        $region20: #{tpu_custom_call.1} parent=15 // pred_fallthru
          _
        // Predicated region
        $region21: #{tpu_custom_call.1} parent=15 // pred_check
          %p203 = pneg %p85
        $region22: #{tpu_custom_call.1} parent=15 // pred_check_branch
          %205 = sbr.rel (%p203) target = $region24
        $region23: #{tpu_custom_call.1} parent=15 // pred_region
          %p206 = scmp.lt.s32.totalorder %s27, 1
          %s207 = scalar_select %p206, %s27, 1
          %s208 = smul.addr %s207, 8
          %s209 = scalar_lea.vmem %s1, %s208
        $region24: #{tpu_custom_call.1} parent=15 // pred_fallthru
          _
        // Predicated region
        $region25: #{tpu_custom_call.1} parent=15 // pred_check
          %p210 = pneg %p111
        $region26: #{tpu_custom_call.1} parent=15 // pred_check_branch
          %212 = sbr.rel (%p210) target = $region28
        $region27: #{tpu_custom_call.1} parent=15 // pred_region
          %s213 = sand.u32 %s101, 1
          %s214 = scalar_lea.sflag [#allocation5], %s213
          %s215 = sand.u32 %s101, 1
          %s216 = smul.addr %s215, 64
          %s217 = scalar_lea.vmem [#allocation4], %s216
          %s218 = smul.u32 4, %s29
          %s220 = ssub.s32 1024, 1024
          %221 = vsyncadd %s214, %s220
          %s222 = smul.addr %s218, 128
          %s223 = scalar_lea.hbm %s2, %s222
          %s224 = sshll.u32 %s217, 4
          %s225 = int_to_ptr.vmem [resolvable:$true] %s224
          %230 = dma.hbm_to_vmem [thread:$0]  %s223, 1024, %s225, %s214, 1024, 512, 32
        $region28: #{tpu_custom_call.1} parent=15 // pred_fallthru
          _
      $region16: #{tpu_custom_call.1} parent=5 // pred_fallthru
        _
      %p231 = scmp.le.s32.totalorder 1, %s20
      %p232 = scmp.lt.s32.totalorder %s20, 9
      %p233 = pnand %p231, %p232
      %p234 = pneg %p233
      // Predicated region
      $region29: #{tpu_custom_call.1} parent=5 // pred_check
        _
      $region30: #{tpu_custom_call.1} parent=5 // pred_check_branch
        %236 = sbr.rel (%p233) target = $region32
      $region31: #{tpu_custom_call.1} parent=5 // pred_region
        %s237 = ssub.s32 %s20, 1
        %s238 = sand.u32 %s104, 1
        %s239 = scalar_lea.sflag [#allocation5], %s238
        %s240 = sand.u32 %s104, 1
        %s241 = smul.addr %s240, 64
        %s242 = scalar_lea.vmem [#allocation4], %s241
        // Predicated region
        $region33: #{tpu_custom_call.1} parent=31 // pred_check
          %p243 = pneg %p117
        $region34: #{tpu_custom_call.1} parent=31 // pred_check_branch
          %245 = sbr.rel (%p243) target = $region36
        $region35: #{tpu_custom_call.1} parent=31 // pred_region
          %246 = dma.done %s239, 1024
        $region36: #{tpu_custom_call.1} parent=31 // pred_fallthru
          _
        %p247 = scmp.lt.s32.totalorder %s30, 1
        %s248 = scalar_select %p247, %s30, 1
        %s249 = smul.addr %s248, 8
        %s250 = scalar_lea.vmem %s0, %s249
        %p251 = pneg %p65
        %p252 = pneg %p62
        %p253 = scmp.lt.s32.totalorder %s30, 1
        %s254 = scalar_select %p253, %s30, 1
        %s255 = smul.addr %s254, 8
        %s256 = scalar_lea.vmem %s1, %s255
        %p257 = pneg %p91
        %p258 = pneg %p88
        %s259 = sand.u32 %s104, 1
        %s260 = scalar_lea.sflag [#allocation5], %s259
        %s261 = sand.u32 %s104, 1
        %s262 = smul.addr %s261, 64
        %s263 = scalar_lea.vmem [#allocation4], %s262
        %p264 = pneg %p117
        %p265 = pneg %p114
        %p266 = pneg %p147
        %p267 = pneg %p144
        %s268 = sand.u32 %s134, 1
        %s269 = scalar_lea.sflag [#allocation6], %s268
        %s270 = sand.u32 %s134, 1
        %s271 = smul.addr %s270, 16
        %s272 = scalar_lea.vmem [#allocation7], %s271
        %p273 = pneg %p177
        %p274 = pneg %p174
        %s275 = sand.u32 %s164, 1
        %s276 = scalar_lea.sflag [#allocation9], %s275
        %s277 = sand.u32 %s164, 1
        %s278 = smul.addr %s277, 4
        %s279 = scalar_lea.vmem [#allocation8], %s278
        %p280 = scmp.lt.s32.totalorder %s30, 1
        %s281 = scalar_select %p280, %s30, 1
        %s282 = smul.addr %s281, 8
        %s283 = scalar_lea.vmem %s0, %s282
        %p284 = scmp.lt.s32.totalorder %s30, 1
        %s285 = scalar_select %p284, %s30, 1
        %s286 = smul.addr %s285, 8
        %s287 = scalar_lea.vmem %s1, %s286
        %s288 = smul.u32 4, %s32
        %s289 = smul.u32 %s32, %s31
        %s290 = smul.u32 4, %s289
        %s291 = smul.u32 %s32, %s31
        %s292 = smul.u32 4, %s291
        %v293 = vld [vmem:[%s283] sm:$0xff]
        %v294 = vld [vmem:[%s242] sm:$0xff]
        %v295 = vld [vmem:[%s242 + $0x8] sm:$0xff]
        %v296 = vld [vmem:[%s242 + $0x10] sm:$0xff]
        %v297 = vld [vmem:[%s242 + $0x18] sm:$0xff]
        %v298 = vld [vmem:[%s242 + $0x20] sm:$0x1]
        %v299 = vld [vmem:[%s242 + $0x28] sm:$0x1]
        %v300 = vld [vmem:[%s242 + $0x30] sm:$0x1]
        %v301 = vld [vmem:[%s242 + $0x38] sm:$0x1]
        %303 = vset.pattern.permute.xlu0 2
        %304 = vperm.xlu0 %303, %v293
        %v305 = vpop.permute.xlu0 %304
        %v307 = vlaneseq
        %v308 = vshrl.u32 %v307, 7
        %v309 = vsub.s32 6, %v308
        %v310 = vrot.slane %v294, %v309
        %v311 = vlaneseq
        %v312 = vshrl.u32 %v311, 7
        %v313 = vsub.s32 6, %v312
        %v314 = vrot.slane %v295, %v313
        %v315 = vlaneseq
        %v316 = vshrl.u32 %v315, 7
        %v317 = vsub.s32 6, %v316
        %v318 = vrot.slane %v296, %v317
        %v319 = vlaneseq
        %v320 = vshrl.u32 %v319, 7
        %v321 = vsub.s32 6, %v320
        %v322 = vrot.slane %v297, %v321
        %v323 = vmin.f32 %v305, %v310
        %v324 = vmin.f32 %v305, %v314
        %v325 = vmin.f32 %v305, %v318
        %v326 = vmin.f32 %v305, %v322
        %327 = vset.pattern.permute.xlu0 0
        %328 = vperm.xlu0 %327, %v293
        %v329 = vpop.permute.xlu0 %328
        %v331 = vlaneseq
        %v332 = vshrl.u32 %v331, 7
        %v333 = vsub.s32 4, %v332
        %v334 = vrot.slane %v294, %v333
        %v335 = vlaneseq
        %v336 = vshrl.u32 %v335, 7
        %v337 = vsub.s32 4, %v336
        %v338 = vrot.slane %v295, %v337
        %v339 = vlaneseq
        %v340 = vshrl.u32 %v339, 7
        %v341 = vsub.s32 4, %v340
        %v342 = vrot.slane %v296, %v341
        %v343 = vlaneseq
        %v344 = vshrl.u32 %v343, 7
        %v345 = vsub.s32 4, %v344
        %v346 = vrot.slane %v297, %v345
        %v347 = vmax.f32 %v329, %v334
        %v348 = vmax.f32 %v329, %v338
        %v349 = vmax.f32 %v329, %v342
        %v350 = vmax.f32 %v329, %v346
        %v351 = vsub.f32 %v323, %v347
        %v352 = vsub.f32 %v324, %v348
        %v353 = vsub.f32 %v325, %v349
        %v354 = vsub.f32 %v326, %v350
        %v355 = vmax.f32 %v351, 0.0
        %v356 = vmax.f32 %v352, 0.0
        %v357 = vmax.f32 %v353, 0.0
        %v358 = vmax.f32 %v354, 0.0
        %359 = vset.pattern.permute.xlu0 3
        %360 = vperm.xlu0 %359, %v293
        %v361 = vpop.permute.xlu0 %360
        %v363 = vlaneseq
        %v364 = vshrl.u32 %v363, 7
        %v365 = vsub.s32 7, %v364
        %v366 = vrot.slane %v294, %v365
        %v367 = vlaneseq
        %v368 = vshrl.u32 %v367, 7
        %v369 = vsub.s32 7, %v368
        %v370 = vrot.slane %v295, %v369
        %v371 = vlaneseq
        %v372 = vshrl.u32 %v371, 7
        %v373 = vsub.s32 7, %v372
        %v374 = vrot.slane %v296, %v373
        %v375 = vlaneseq
        %v376 = vshrl.u32 %v375, 7
        %v377 = vsub.s32 7, %v376
        %v378 = vrot.slane %v297, %v377
        %v379 = vmin.f32 %v361, %v366
        %v380 = vmin.f32 %v361, %v370
        %v381 = vmin.f32 %v361, %v374
        %v382 = vmin.f32 %v361, %v378
        %383 = vset.pattern.permute.xlu0 1
        %384 = vperm.xlu0 %383, %v293
        %v385 = vpop.permute.xlu0 %384
        %v387 = vlaneseq
        %v388 = vshrl.u32 %v387, 7
        %v389 = vsub.s32 5, %v388
        %v390 = vrot.slane %v294, %v389
        %v391 = vlaneseq
        %v392 = vshrl.u32 %v391, 7
        %v393 = vsub.s32 5, %v392
        %v394 = vrot.slane %v295, %v393
        %v395 = vlaneseq
        %v396 = vshrl.u32 %v395, 7
        %v397 = vsub.s32 5, %v396
        %v398 = vrot.slane %v296, %v397
        %v399 = vlaneseq
        %v400 = vshrl.u32 %v399, 7
        %v401 = vsub.s32 5, %v400
        %v402 = vrot.slane %v297, %v401
        %v403 = vmax.f32 %v385, %v390
        %v404 = vmax.f32 %v385, %v394
        %v405 = vmax.f32 %v385, %v398
        %v406 = vmax.f32 %v385, %v402
        %v407 = vsub.f32 %v379, %v403
        %v408 = vsub.f32 %v380, %v404
        %v409 = vsub.f32 %v381, %v405
        %v410 = vsub.f32 %v382, %v406
        %v411 = vmax.f32 %v407, 0.0
        %v412 = vmax.f32 %v408, 0.0
        %v413 = vmax.f32 %v409, 0.0
        %v414 = vmax.f32 %v410, 0.0
        %v415 = vmul.f32 %v355, %v411
        %v416 = vmul.f32 %v356, %v412
        %v417 = vmul.f32 %v357, %v413
        %v418 = vmul.f32 %v358, %v414
        %419 = vrot.lane.b32.xlu0 %v293, 2
        %v420 = vpop.permute.xlu0 %419
        %v422 = vsub.f32 %v293, %v420
        %424 = vrot.lane.b32.xlu0 %v422, 127
        %v425 = vpop.permute.xlu0 %424
        %v427 = vmul.f32 %v422, %v425
        %429 = vset.pattern.permute.xlu0 2
        %430 = vperm.xlu0 %429, %v427
        %v431 = vpop.permute.xlu0 %430
        %v433 = vlaneseq
        %v434 = vshrl.u32 %v433, 7
        %v435 = vsub.s32 0, %v434
        %v436 = vrot.slane %v298, %v435
        %v437 = vlaneseq
        %v438 = vshrl.u32 %v437, 7
        %v439 = vsub.s32 0, %v438
        %v440 = vrot.slane %v299, %v439
        %v441 = vlaneseq
        %v442 = vshrl.u32 %v441, 7
        %v443 = vsub.s32 0, %v442
        %v444 = vrot.slane %v300, %v443
        %v445 = vlaneseq
        %v446 = vshrl.u32 %v445, 7
        %v447 = vsub.s32 0, %v446
        %v448 = vrot.slane %v301, %v447
        %v449 = vadd.f32 %v431, %v436
        %v450 = vadd.f32 %v431, %v440
        %v451 = vadd.f32 %v431, %v444
        %v452 = vadd.f32 %v431, %v448
        %v453 = vsub.f32 %v449, %v415
        %v454 = vsub.f32 %v450, %v416
        %v455 = vsub.f32 %v451, %v417
        %v456 = vsub.f32 %v452, %v418
        %v457 = vadd.f32 %v453, 1e-12
        %v458 = vadd.f32 %v454, 1e-12
        %v459 = vadd.f32 %v455, 1e-12
        %v460 = vadd.f32 %v456, 1e-12
        %v461 = vrcp.pop %v457
        %v462 = vmul.f32 %v415, %v461
        %v463 = vrcp.pop %v458
        %v464 = vmul.f32 %v416, %v463
        %v465 = vrcp.pop %v459
        %v466 = vmul.f32 %v417, %v465
        %v467 = vrcp.pop %v460
        %v468 = vmul.f32 %v418, %v467
        %v469 = vlaneseq
        %v470 = vshrl.u32 %v469, 7
        %v471 = vlaneseq
        %v472 = vand.u32 %v471, 127
        %v473 = vadd.s32 %v472, 128
        %v474 = vadd.s32 %v472, 256
        %v475 = vadd.s32 %v472, 384
        %s476 = smul.u32 %s32, 512
        %v477 = vstv %s476
        %v478 = vadd.s32 %v472, %v477
        %v479 = vadd.s32 %v473, %v477
        %v480 = vadd.s32 %v474, %v477
        %v481 = vadd.s32 %v475, %v477
        %p482 = scmp.eq.s32.totalorder %s31, 0
        // Predicated region
        $region37: #{tpu_custom_call.1} parent=31 // pred_check
          %p483 = pneg %p482
        $region38: #{tpu_custom_call.1} parent=31 // pred_check_branch
          %485 = sbr.rel (%p483) target = $region40
        $region39: #{tpu_custom_call.1} parent=31 // pred_region
          %p486 = scmp.eq.s32.totalorder %s32, 0
          // Predicated region
          $region41: #{tpu_custom_call.1} parent=39 // pred_check
            %p487 = pneg %p486
          $region42: #{tpu_custom_call.1} parent=39 // pred_check_branch
            %489 = sbr.rel (%p487) target = $region44
          $region43: #{tpu_custom_call.1} parent=39 // pred_region
            %vm490 = vcmask 7168
            %491 = vst.msk [vmem:[#allocation2] sm:$0xff] %vm490, -1.0
            %492 = vst.msk [vmem:[#allocation3] sm:$0xff] %vm490, 0
          $region44: #{tpu_custom_call.1} parent=39 // pred_fallthru
            _
          %v493 = vmax.f32 %v462, %v464
          %v494 = vmax.f32 %v466, %v468
          %v495 = vmax.f32 %v493, %v494
          %496 = vmax.xlane.f32.xlu0 %v495
          %v497 = vpop.xlane.xlu0 %496
          %vm498 = vcmp.ge.f32.partialorder %v462, %v497
          %vm499 = vcmp.ge.f32.partialorder %v464, %v497
          %vm500 = vcmp.ge.f32.partialorder %v466, %v497
          %vm501 = vcmp.ge.f32.partialorder %v468, %v497
          %v502 = vsel %vm498, %v478, 2147483647
          %v503 = vsel %vm499, %v479, 2147483647
          %v504 = vsel %vm500, %v480, 2147483647
          %v505 = vsel %vm501, %v481, 2147483647
          %vm506 = vcmp.lt.s32.totalorder %v502, %v503
          %v507 = vsel %vm506, %v502, %v503
          %vm508 = vcmp.lt.s32.totalorder %v504, %v505
          %v509 = vsel %vm508, %v504, %v505
          %vm510 = vcmp.lt.s32.totalorder %v507, %v509
          %v511 = vsel %vm510, %v507, %v509
          %v512 = vand.u32 %v511, 65535
          %v513 = vshra.s32 %v511, 16
          %v514 = vcvt.s32.f32 %v512
          %v515 = vcvt.s32.f32 %v513
          %516 = vmin.xlane.f32.xlu0 %v515
          %v517 = vpop.xlane.xlu0 %516
          %vm518 = vcmp.eq.f32.partialorder %v515, %v517
          %v519 = vsel %vm518, %v514, inf
          %520 = vmin.xlane.f32.xlu0 %v519
          %v521 = vpop.xlane.xlu0 %520
          %v522 = vcvt.f32.s32 %v521
          %v523 = vcvt.f32.s32 %v517
          %v524 = vshll.u32 %v523, 16
          %v525 = vadd.s32 %v524, %v522
          %v526 = vld [vmem:[#allocation2] sm:$0xff]
          %vm527 = vcmp.gt.f32.partialorder %v497, %v526
          %v528 = vld [vmem:[#allocation3] sm:$0xff]
          %v529 = vsel %vm527, %v525, %v528
          %vm530 = vcmask 7168
          %531 = vst.msk [vmem:[#allocation3] sm:$0xff] %vm530, %v529
          %v532 = vld [vmem:[#allocation2] sm:$0xff]
          %v533 = vsel %vm527, %v497, %v532
          %534 = vst.msk [vmem:[#allocation2] sm:$0xff] %vm530, %v533
        $region40: #{tpu_custom_call.1} parent=31 // pred_fallthru
          _
        %p535 = scmp.eq.s32.totalorder %s31, 1
        // Predicated region
        $region45: #{tpu_custom_call.1} parent=31 // pred_check
          %p536 = pneg %p535
        $region46: #{tpu_custom_call.1} parent=31 // pred_check_branch
          %538 = sbr.rel (%p536) target = $region48
        $region47: #{tpu_custom_call.1} parent=31 // pred_region
          %v539 = vld [vmem:[%s287] sm:$0xff]
          %v540 = vrot.slane %v462, 4
          %v541 = vmax.f32 %v462, %v540
          %v542 = vrot.slane %v541, 2
          %v543 = vmax.f32 %v541, %v542
          %v544 = vrot.slane %v543, 1
          %v545 = vmax.f32 %v543, %v544
          %v546 = vrot.slane %v464, 4
          %v547 = vmax.f32 %v464, %v546
          %v548 = vrot.slane %v547, 2
          %v549 = vmax.f32 %v547, %v548
          %v550 = vrot.slane %v549, 1
          %v551 = vmax.f32 %v549, %v550
          %v552 = vrot.slane %v466, 4
          %v553 = vmax.f32 %v466, %v552
          %v554 = vrot.slane %v553, 2
          %v555 = vmax.f32 %v553, %v554
          %v556 = vrot.slane %v555, 1
          %v557 = vmax.f32 %v555, %v556
          %v558 = vrot.slane %v468, 4
          %v559 = vmax.f32 %v468, %v558
          %v560 = vrot.slane %v559, 2
          %v561 = vmax.f32 %v559, %v560
          %v562 = vrot.slane %v561, 1
          %v563 = vmax.f32 %v561, %v562
          %vm564 = vcmp.ge.f32.partialorder %v462, %v545
          %vm565 = vcmp.ge.f32.partialorder %v464, %v551
          %vm566 = vcmp.ge.f32.partialorder %v466, %v557
          %vm567 = vcmp.ge.f32.partialorder %v468, %v563
          %v568 = vsel %vm564, %v470, 8
          %v569 = vsel %vm565, %v470, 8
          %v570 = vsel %vm566, %v470, 8
          %v571 = vsel %vm567, %v470, 8
          %v572 = vrot.slane %v568, 4
          %vm573 = vcmp.lt.s32.totalorder %v568, %v572
          %v574 = vsel %vm573, %v568, %v572
          %v575 = vrot.slane %v574, 2
          %vm576 = vcmp.lt.s32.totalorder %v574, %v575
          %v577 = vsel %vm576, %v574, %v575
          %v578 = vrot.slane %v577, 1
          %vm579 = vcmp.lt.s32.totalorder %v577, %v578
          %v580 = vsel %vm579, %v577, %v578
          %v581 = vrot.slane %v569, 4
          %vm582 = vcmp.lt.s32.totalorder %v569, %v581
          %v583 = vsel %vm582, %v569, %v581
          %v584 = vrot.slane %v583, 2
          %vm585 = vcmp.lt.s32.totalorder %v583, %v584
          %v586 = vsel %vm585, %v583, %v584
          %v587 = vrot.slane %v586, 1
          %vm588 = vcmp.lt.s32.totalorder %v586, %v587
          %v589 = vsel %vm588, %v586, %v587
          %v590 = vrot.slane %v570, 4
          %vm591 = vcmp.lt.s32.totalorder %v570, %v590
          %v592 = vsel %vm591, %v570, %v590
          %v593 = vrot.slane %v592, 2
          %vm594 = vcmp.lt.s32.totalorder %v592, %v593
          %v595 = vsel %vm594, %v592, %v593
          %v596 = vrot.slane %v595, 1
          %vm597 = vcmp.lt.s32.totalorder %v595, %v596
          %v598 = vsel %vm597, %v595, %v596
          %v599 = vrot.slane %v571, 4
          %vm600 = vcmp.lt.s32.totalorder %v571, %v599
          %v601 = vsel %vm600, %v571, %v599
          %v602 = vrot.slane %v601, 2
          %vm603 = vcmp.lt.s32.totalorder %v601, %v602
          %v604 = vsel %vm603, %v601, %v602
          %v605 = vrot.slane %v604, 1
          %vm606 = vcmp.lt.s32.totalorder %v604, %v605
          %v607 = vsel %vm606, %v604, %v605
          %v608 = vld [vmem:[#allocation3] sm:$0xff]
          %609 = vset.pattern.permute.xlu0 0
          %610 = vperm.xlu0 %609, %v608
          %v611 = vpop.permute.xlu0 %610
          %vm612 = vcmp.eq.s32.totalorder %v478, %v611
          %vm613 = vcmp.eq.s32.totalorder %v479, %v611
          %vm614 = vcmp.eq.s32.totalorder %v480, %v611
          %vm615 = vcmp.eq.s32.totalorder %v481, %v611
          %v616 = vsel %vm612, %v470, 4294967295
          %v617 = vsel %vm613, %v470, 4294967295
          %v618 = vsel %vm614, %v470, 4294967295
          %v619 = vsel %vm615, %v470, 4294967295
          %v620 = vrot.slane %v616, 4
          %vm621 = vcmp.gt.s32.totalorder %v616, %v620
          %v622 = vsel %vm621, %v616, %v620
          %v623 = vrot.slane %v622, 2
          %vm624 = vcmp.gt.s32.totalorder %v622, %v623
          %v625 = vsel %vm624, %v622, %v623
          %v626 = vrot.slane %v625, 1
          %vm627 = vcmp.gt.s32.totalorder %v625, %v626
          %v628 = vsel %vm627, %v625, %v626
          %v629 = vrot.slane %v617, 4
          %vm630 = vcmp.gt.s32.totalorder %v617, %v629
          %v631 = vsel %vm630, %v617, %v629
          %v632 = vrot.slane %v631, 2
          %vm633 = vcmp.gt.s32.totalorder %v631, %v632
          %v634 = vsel %vm633, %v631, %v632
          %v635 = vrot.slane %v634, 1
          %vm636 = vcmp.gt.s32.totalorder %v634, %v635
          %v637 = vsel %vm636, %v634, %v635
          %v638 = vrot.slane %v618, 4
          %vm639 = vcmp.gt.s32.totalorder %v618, %v638
          %v640 = vsel %vm639, %v618, %v638
          %v641 = vrot.slane %v640, 2
          %vm642 = vcmp.gt.s32.totalorder %v640, %v641
          %v643 = vsel %vm642, %v640, %v641
          %v644 = vrot.slane %v643, 1
          %vm645 = vcmp.gt.s32.totalorder %v643, %v644
          %v646 = vsel %vm645, %v643, %v644
          %v647 = vrot.slane %v619, 4
          %vm648 = vcmp.gt.s32.totalorder %v619, %v647
          %v649 = vsel %vm648, %v619, %v647
          %v650 = vrot.slane %v649, 2
          %vm651 = vcmp.gt.s32.totalorder %v649, %v650
          %v652 = vsel %vm651, %v649, %v650
          %v653 = vrot.slane %v652, 1
          %vm654 = vcmp.gt.s32.totalorder %v652, %v653
          %v655 = vsel %vm654, %v652, %v653
          %vm656 = vcmp.ge.s32.totalorder %v628, 0
          %vm657 = vcmp.ge.s32.totalorder %v637, 0
          %vm658 = vcmp.ge.s32.totalorder %v646, 0
          %vm659 = vcmp.ge.s32.totalorder %v655, 0
          %v660 = vsel %vm656, %v628, %v580
          %v661 = vsel %vm657, %v637, %v589
          %v662 = vsel %vm658, %v646, %v598
          %v663 = vsel %vm659, %v655, %v607
          %v664 = vsel %vm656, 2.0, %v545
          %v665 = vsel %vm657, 2.0, %v551
          %v666 = vsel %vm658, 2.0, %v557
          %v667 = vsel %vm659, 2.0, %v563
          %vm668 = vcmp.eq.s32.totalorder %v470, %v660
          %vm669 = vcmp.eq.s32.totalorder %v470, %v661
          %vm670 = vcmp.eq.s32.totalorder %v470, %v662
          %vm671 = vcmp.eq.s32.totalorder %v470, %v663
          %v672 = vsel %vm668, 1, 0
          %v673 = vsel %vm669, 1, 0
          %v674 = vsel %vm670, 1, 0
          %v675 = vsel %vm671, 1, 0
          %v676 = vcvt.s32.f32 %v672
          %v677 = vcvt.s32.f32 %v673
          %v678 = vcvt.s32.f32 %v674
          %v679 = vcvt.s32.f32 %v675
          %681 = vrot.lane.b32.xlu0 %v539, 4
          %v682 = vpop.permute.xlu0 %681
          %vm684 = vcmask 31744
          %v685 = vsel %vm684, %v293, %v682
          %vm686 = vcmask 39936
          %v687 = vsel %vm686, %v685, 0.0
          %688 = vxpose.xlu0.b32.start [1/16] %v687, 128
          %689 = vxpose.xlu0.b32.cont [2/16] 0.0, 128
          %690 = vxpose.xlu0.b32.cont [3/16] 0.0, 128
          %691 = vxpose.xlu0.b32.cont [4/16] 0.0, 128
          %692 = vxpose.xlu0.b32.cont [5/16] 0.0, 128
          %693 = vxpose.xlu0.b32.cont [6/16] 0.0, 128
          %694 = vxpose.xlu0.b32.cont [7/16] 0.0, 128
          %695 = vxpose.xlu0.b32.cont [8/16] 0.0, 128
          %696 = vxpose.xlu0.b32.cont [9/16] 0.0, 128
          %697 = vxpose.xlu0.b32.cont [10/16] 0.0, 128
          %698 = vxpose.xlu0.b32.cont [11/16] 0.0, 128
          %699 = vxpose.xlu0.b32.cont [12/16] 0.0, 128
          %700 = vxpose.xlu0.b32.cont [13/16] 0.0, 128
          %701 = vxpose.xlu0.b32.cont [14/16] 0.0, 128
          %702 = vxpose.xlu0.b32.cont [15/16] 0.0, 128
          %703 = vxpose.xlu0.b32.end [16/16] 0.0, 128
          %v704 = vpop.trf.xlu0
          %v705 = vpop.trf.xlu0
          %v706 = vpop.trf.xlu0
          %v707 = vpop.trf.xlu0
          %v708 = vpop.trf.xlu0
          %v709 = vpop.trf.xlu0
          %v710 = vpop.trf.xlu0
          %v711 = vpop.trf.xlu0
          %v712 = vpop.trf.xlu0
          %v713 = vpop.trf.xlu0
          %v714 = vpop.trf.xlu0
          %v715 = vpop.trf.xlu0
          %v716 = vpop.trf.xlu0
          %v717 = vpop.trf.xlu0
          %v718 = vpop.trf.xlu0
          %v719 = vpop.trf.xlu0
          %vm720 = vcmask 64512
          %v722 = vsel %vm720, %v704, 0
          %724 = vmatprep.subr.mxu0 0.0
          %725 = vmatpush1.msra.mxu0 0.0
          %726 = vmatprep.subr.mxu0 0.0
          %727 = vmatpush1.msra.mxu0 0.0
          %728 = vmatprep.subr.mxu0 0.0
          %729 = vmatpush1.msra.mxu0 0.0
          %730 = vmatprep.subr.mxu0 0.0
          %731 = vmatpush1.msra.mxu0 0.0
          %732 = vmatprep.subr.mxu0 0.0
          %733 = vmatpush1.msra.mxu0 0.0
          %734 = vmatprep.subr.mxu0 0.0
          %735 = vmatpush1.msra.mxu0 0.0
          %736 = vmatprep.subr.mxu0 0.0
          %737 = vmatpush1.msra.mxu0 0.0
          %738 = vmatprep.subr.mxu0 0.0
          %739 = vmatpush1.msra.mxu0 0.0
          %740 = vmatprep.subr.mxu0 0.0
          %741 = vmatpush1.msra.mxu0 0.0
          %742 = vmatprep.subr.mxu0 0.0
          %743 = vmatpush1.msra.mxu0 0.0
          %744 = vmatprep.subr.mxu0 0.0
          %745 = vmatpush1.msra.mxu0 0.0
          %746 = vmatprep.subr.mxu0 0.0
          %747 = vmatpush1.msra.mxu0 0.0
          %748 = vmatprep.subr.mxu0 0.0
          %749 = vmatpush1.msra.mxu0 0.0
          %750 = vmatprep.subr.mxu0 0.0
          %751 = vmatpush1.msra.mxu0 0.0
          %752 = vmatprep.subr.mxu0 0.0
          %753 = vmatpush1.msra.mxu0 0.0
          %v754 = vand.u32 %v677, 4294901760
          %755 = vmatprep.subr.mxu0 %v754
          %v756 = vand.u32 %v676, 4294901760
          %757 = vmatpush1.msra.mxu0 %v756
          %758 = vmatprep.subr.mxu0 0.0
          %759 = vmatpush2.msra.mxu0 0.0
          %760 = vmatprep.subr.mxu0 0.0
          %761 = vmatpush2.msra.mxu0 0.0
          %762 = vmatprep.subr.mxu0 0.0
          %763 = vmatpush2.msra.mxu0 0.0
          %764 = vmatprep.subr.mxu0 0.0
          %765 = vmatpush2.msra.mxu0 0.0
          %766 = vmatprep.subr.mxu0 0.0
          %767 = vmatpush2.msra.mxu0 0.0
          %768 = vmatprep.subr.mxu0 0.0
          %769 = vmatpush2.msra.mxu0 0.0
          %770 = vmatprep.subr.mxu0 0.0
          %771 = vmatpush2.msra.mxu0 0.0
          %772 = vmatprep.subr.mxu0 0.0
          %773 = vmatpush2.msra.mxu0 0.0
          %774 = vmatprep.subr.mxu0 0.0
          %775 = vmatpush2.msra.mxu0 0.0
          %776 = vmatprep.subr.mxu0 0.0
          %777 = vmatpush2.msra.mxu0 0.0
          %778 = vmatprep.subr.mxu0 0.0
          %779 = vmatpush2.msra.mxu0 0.0
          %780 = vmatprep.subr.mxu0 0.0
          %781 = vmatpush2.msra.mxu0 0.0
          %782 = vmatprep.subr.mxu0 0.0
          %783 = vmatpush2.msra.mxu0 0.0
          %784 = vmatprep.subr.mxu0 0.0
          %785 = vmatpush2.msra.mxu0 0.0
          %786 = vmatprep.subr.mxu0 0.0
          %787 = vmatpush2.msra.mxu0 0.0
          %788 = vmatprep.subr.mxu0 0.0
          %789 = vmatpush2.msra.mxu0 0.0
          %790 = vmatprep.mubr.f32.mxu0 0.0
          %v791 = vand.u32 %v722, 4294901760
          %v792 = vsub.f32 %v722, %v791
          %v793 = vand.u32 %v792, 4294901760
          %v794 = vsub.f32 %v792, %v793
          %v795 = vand.u32 %v794, 4294901760
          %796 = vmatmul.mubr.f32.gmra.mxu0 %v795
          %v797 = vpop.f32.mrf.mxu0
          %v798 = vadd.f32 0.0, %v797
          %v799 = vpop.f32.mrf.mxu0
          %v800 = vadd.f32 0.0, %v799
          %801 = vdwg.mxu0
          %802 = vmatprep.subr.mxu0 0.0
          %803 = vmatpush1.msra.mxu0 0.0
          %804 = vmatprep.subr.mxu0 0.0
          %805 = vmatpush1.msra.mxu0 0.0
          %806 = vmatprep.subr.mxu0 0.0
          %807 = vmatpush1.msra.mxu0 0.0
          %808 = vmatprep.subr.mxu0 0.0
          %809 = vmatpush1.msra.mxu0 0.0
          %810 = vmatprep.subr.mxu0 0.0
          %811 = vmatpush1.msra.mxu0 0.0
          %812 = vmatprep.subr.mxu0 0.0
          %813 = vmatpush1.msra.mxu0 0.0
          %814 = vmatprep.subr.mxu0 0.0
          %815 = vmatpush1.msra.mxu0 0.0
          %816 = vmatprep.subr.mxu0 0.0
          %817 = vmatpush1.msra.mxu0 0.0
          %818 = vmatprep.subr.mxu0 0.0
          %819 = vmatpush1.msra.mxu0 0.0
          %820 = vmatprep.subr.mxu0 0.0
          %821 = vmatpush1.msra.mxu0 0.0
          %822 = vmatprep.subr.mxu0 0.0
          %823 = vmatpush1.msra.mxu0 0.0
          %824 = vmatprep.subr.mxu0 0.0
          %825 = vmatpush1.msra.mxu0 0.0
          %826 = vmatprep.subr.mxu0 0.0
          %827 = vmatpush1.msra.mxu0 0.0
          %828 = vmatprep.subr.mxu0 0.0
          %829 = vmatpush1.msra.mxu0 0.0
          %830 = vmatprep.subr.mxu0 0.0
          %831 = vmatpush1.msra.mxu0 0.0
          %v832 = vand.u32 %v677, 4294901760
          %v833 = vsub.f32 %v677, %v832
          %v834 = vand.u32 %v833, 4294901760
          %v835 = vsub.f32 %v833, %v834
          %v836 = vand.u32 %v835, 4294901760
          %837 = vmatprep.subr.mxu0 %v836
          %v838 = vand.u32 %v676, 4294901760
          %v839 = vsub.f32 %v676, %v838
          %v840 = vand.u32 %v839, 4294901760
          %v841 = vsub.f32 %v839, %v840
          %v842 = vand.u32 %v841, 4294901760
          %843 = vmatpush1.msra.mxu0 %v842
          %844 = vmatprep.subr.mxu0 0.0
          %845 = vmatpush2.msra.mxu0 0.0
          %846 = vmatprep.subr.mxu0 0.0
          %847 = vmatpush2.msra.mxu0 0.0
          %848 = vmatprep.subr.mxu0 0.0
          %849 = vmatpush2.msra.mxu0 0.0
          %850 = vmatprep.subr.mxu0 0.0
          %851 = vmatpush2.msra.mxu0 0.0
          %852 = vmatprep.subr.mxu0 0.0
          %853 = vmatpush2.msra.mxu0 0.0
          %854 = vmatprep.subr.mxu0 0.0
          %855 = vmatpush2.msra.mxu0 0.0
          %856 = vmatprep.subr.mxu0 0.0
          %857 = vmatpush2.msra.mxu0 0.0
          %858 = vmatprep.subr.mxu0 0.0
          %859 = vmatpush2.msra.mxu0 0.0
          %860 = vmatprep.subr.mxu0 0.0
          %861 = vmatpush2.msra.mxu0 0.0
          %862 = vmatprep.subr.mxu0 0.0
          %863 = vmatpush2.msra.mxu0 0.0
          %864 = vmatprep.subr.mxu0 0.0
          %865 = vmatpush2.msra.mxu0 0.0
          %866 = vmatprep.subr.mxu0 0.0
          %867 = vmatpush2.msra.mxu0 0.0
          %868 = vmatprep.subr.mxu0 0.0
          %869 = vmatpush2.msra.mxu0 0.0
          %870 = vmatprep.subr.mxu0 0.0
          %871 = vmatpush2.msra.mxu0 0.0
          %872 = vmatprep.subr.mxu0 0.0
          %873 = vmatpush2.msra.mxu0 0.0
          %874 = vmatprep.subr.mxu0 0.0
          %875 = vmatpush2.msra.mxu0 0.0
          %876 = vmatprep.mubr.f32.mxu0 0.0
          %v877 = vand.u32 %v722, 4294901760
          %878 = vmatmul.mubr.f32.gmra.mxu0 %v877
          %v879 = vpop.f32.mrf.mxu0
          %v880 = vadd.f32 %v798, %v879
          %v881 = vpop.f32.mrf.mxu0
          %v882 = vadd.f32 %v800, %v881
          %883 = vdwg.mxu0
          %884 = vmatprep.subr.mxu0 0.0
          %885 = vmatpush1.msra.mxu0 0.0
          %886 = vmatprep.subr.mxu0 0.0
          %887 = vmatpush1.msra.mxu0 0.0
          %888 = vmatprep.subr.mxu0 0.0
          %889 = vmatpush1.msra.mxu0 0.0
          %890 = vmatprep.subr.mxu0 0.0
          %891 = vmatpush1.msra.mxu0 0.0
          %892 = vmatprep.subr.mxu0 0.0
          %893 = vmatpush1.msra.mxu0 0.0
          %894 = vmatprep.subr.mxu0 0.0
          %895 = vmatpush1.msra.mxu0 0.0
          %896 = vmatprep.subr.mxu0 0.0
          %897 = vmatpush1.msra.mxu0 0.0
          %898 = vmatprep.subr.mxu0 0.0
          %899 = vmatpush1.msra.mxu0 0.0
          %900 = vmatprep.subr.mxu0 0.0
          %901 = vmatpush1.msra.mxu0 0.0
          %902 = vmatprep.subr.mxu0 0.0
          %903 = vmatpush1.msra.mxu0 0.0
          %904 = vmatprep.subr.mxu0 0.0
          %905 = vmatpush1.msra.mxu0 0.0
          %906 = vmatprep.subr.mxu0 0.0
          %907 = vmatpush1.msra.mxu0 0.0
          %908 = vmatprep.subr.mxu0 0.0
          %909 = vmatpush1.msra.mxu0 0.0
          %910 = vmatprep.subr.mxu0 0.0
          %911 = vmatpush1.msra.mxu0 0.0
          %912 = vmatprep.subr.mxu0 0.0
          %913 = vmatpush1.msra.mxu0 0.0
          %v914 = vand.u32 %v677, 4294901760
          %v915 = vsub.f32 %v677, %v914
          %916 = vmatprep.subr.mxu0 %v915
          %v917 = vand.u32 %v676, 4294901760
          %v918 = vsub.f32 %v676, %v917
          %919 = vmatpush1.msra.mxu0 %v918
          %920 = vmatprep.subr.mxu0 0.0
          %921 = vmatpush2.msra.mxu0 0.0
          %922 = vmatprep.subr.mxu0 0.0
          %923 = vmatpush2.msra.mxu0 0.0
          %924 = vmatprep.subr.mxu0 0.0
          %925 = vmatpush2.msra.mxu0 0.0
          %926 = vmatprep.subr.mxu0 0.0
          %927 = vmatpush2.msra.mxu0 0.0
          %928 = vmatprep.subr.mxu0 0.0
          %929 = vmatpush2.msra.mxu0 0.0
          %930 = vmatprep.subr.mxu0 0.0
          %931 = vmatpush2.msra.mxu0 0.0
          %932 = vmatprep.subr.mxu0 0.0
          %933 = vmatpush2.msra.mxu0 0.0
          %934 = vmatprep.subr.mxu0 0.0
          %935 = vmatpush2.msra.mxu0 0.0
          %936 = vmatprep.subr.mxu0 0.0
          %937 = vmatpush2.msra.mxu0 0.0
          %938 = vmatprep.subr.mxu0 0.0
          %939 = vmatpush2.msra.mxu0 0.0
          %940 = vmatprep.subr.mxu0 0.0
          %941 = vmatpush2.msra.mxu0 0.0
          %942 = vmatprep.subr.mxu0 0.0
          %943 = vmatpush2.msra.mxu0 0.0
          %944 = vmatprep.subr.mxu0 0.0
          %945 = vmatpush2.msra.mxu0 0.0
          %946 = vmatprep.subr.mxu0 0.0
          %947 = vmatpush2.msra.mxu0 0.0
          %948 = vmatprep.subr.mxu0 0.0
          %949 = vmatpush2.msra.mxu0 0.0
          %950 = vmatprep.subr.mxu0 0.0
          %951 = vmatpush2.msra.mxu0 0.0
          %952 = vmatprep.mubr.f32.mxu0 0.0
          %v953 = vand.u32 %v722, 4294901760
          %v954 = vsub.f32 %v722, %v953
          %955 = vmatmul.mubr.f32.gmra.mxu0 %v954
          %v956 = vpop.f32.mrf.mxu0
          %v957 = vadd.f32 %v880, %v956
          %v958 = vpop.f32.mrf.mxu0
          %v959 = vadd.f32 %v882, %v958
          %960 = vdwg.mxu0
          %961 = vmatprep.subr.mxu0 0.0
          %962 = vmatpush1.msra.mxu0 0.0
          %963 = vmatprep.subr.mxu0 0.0
          %964 = vmatpush1.msra.mxu0 0.0
          %965 = vmatprep.subr.mxu0 0.0
          %966 = vmatpush1.msra.mxu0 0.0
          %967 = vmatprep.subr.mxu0 0.0
          %968 = vmatpush1.msra.mxu0 0.0
          %969 = vmatprep.subr.mxu0 0.0
          %970 = vmatpush1.msra.mxu0 0.0
          %971 = vmatprep.subr.mxu0 0.0
          %972 = vmatpush1.msra.mxu0 0.0
          %973 = vmatprep.subr.mxu0 0.0
          %974 = vmatpush1.msra.mxu0 0.0
          %975 = vmatprep.subr.mxu0 0.0
          %976 = vmatpush1.msra.mxu0 0.0
          %977 = vmatprep.subr.mxu0 0.0
          %978 = vmatpush1.msra.mxu0 0.0
          %979 = vmatprep.subr.mxu0 0.0
          %980 = vmatpush1.msra.mxu0 0.0
          %981 = vmatprep.subr.mxu0 0.0
          %982 = vmatpush1.msra.mxu0 0.0
          %983 = vmatprep.subr.mxu0 0.0
          %984 = vmatpush1.msra.mxu0 0.0
          %985 = vmatprep.subr.mxu0 0.0
          %986 = vmatpush1.msra.mxu0 0.0
          %987 = vmatprep.subr.mxu0 0.0
          %988 = vmatpush1.msra.mxu0 0.0
          %989 = vmatprep.subr.mxu0 0.0
          %990 = vmatpush1.msra.mxu0 0.0
          %v991 = vand.u32 %v677, 4294901760
          %992 = vmatprep.subr.mxu0 %v991
          %v993 = vand.u32 %v676, 4294901760
          %994 = vmatpush1.msra.mxu0 %v993
          %995 = vmatprep.subr.mxu0 0.0
          %996 = vmatpush2.msra.mxu0 0.0
          %997 = vmatprep.subr.mxu0 0.0
          %998 = vmatpush2.msra.mxu0 0.0
          %999 = vmatprep.subr.mxu0 0.0
          %1000 = vmatpush2.msra.mxu0 0.0
          %1001 = vmatprep.subr.mxu0 0.0
          %1002 = vmatpush2.msra.mxu0 0.0
          %1003 = vmatprep.subr.mxu0 0.0
          %1004 = vmatpush2.msra.mxu0 0.0
          %1005 = vmatprep.subr.mxu0 0.0
          %1006 = vmatpush2.msra.mxu0 0.0
          %1007 = vmatprep.subr.mxu0 0.0
          %1008 = vmatpush2.msra.mxu0 0.0
          %1009 = vmatprep.subr.mxu0 0.0
          %1010 = vmatpush2.msra.mxu0 0.0
          %1011 = vmatprep.subr.mxu0 0.0
          %1012 = vmatpush2.msra.mxu0 0.0
          %1013 = vmatprep.subr.mxu0 0.0
          %1014 = vmatpush2.msra.mxu0 0.0
          %1015 = vmatprep.subr.mxu0 0.0
          %1016 = vmatpush2.msra.mxu0 0.0
          %1017 = vmatprep.subr.mxu0 0.0
          %1018 = vmatpush2.msra.mxu0 0.0
          %1019 = vmatprep.subr.mxu0 0.0
          %1020 = vmatpush2.msra.mxu0 0.0
          %1021 = vmatprep.subr.mxu0 0.0
          %1022 = vmatpush2.msra.mxu0 0.0
          %1023 = vmatprep.subr.mxu0 0.0
          %1024 = vmatpush2.msra.mxu0 0.0
          %1025 = vmatprep.subr.mxu0 0.0
          %1026 = vmatpush2.msra.mxu0 0.0
          %1027 = vmatprep.mubr.f32.mxu0 0.0
          %v1028 = vand.u32 %v722, 4294901760
          %v1029 = vsub.f32 %v722, %v1028
          %v1030 = vand.u32 %v1029, 4294901760
          %1031 = vmatmul.mubr.f32.gmra.mxu0 %v1030
          %v1032 = vpop.f32.mrf.mxu0
          %v1033 = vadd.f32 %v957, %v1032
          %v1034 = vpop.f32.mrf.mxu0
          %v1035 = vadd.f32 %v959, %v1034
          %1036 = vdwg.mxu0
          %1037 = vmatprep.subr.mxu0 0.0
          %1038 = vmatpush1.msra.mxu0 0.0
          %1039 = vmatprep.subr.mxu0 0.0
          %1040 = vmatpush1.msra.mxu0 0.0
          %1041 = vmatprep.subr.mxu0 0.0
          %1042 = vmatpush1.msra.mxu0 0.0
          %1043 = vmatprep.subr.mxu0 0.0
          %1044 = vmatpush1.msra.mxu0 0.0
          %1045 = vmatprep.subr.mxu0 0.0
          %1046 = vmatpush1.msra.mxu0 0.0
          %1047 = vmatprep.subr.mxu0 0.0
          %1048 = vmatpush1.msra.mxu0 0.0
          %1049 = vmatprep.subr.mxu0 0.0
          %1050 = vmatpush1.msra.mxu0 0.0
          %1051 = vmatprep.subr.mxu0 0.0
          %1052 = vmatpush1.msra.mxu0 0.0
          %1053 = vmatprep.subr.mxu0 0.0
          %1054 = vmatpush1.msra.mxu0 0.0
          %1055 = vmatprep.subr.mxu0 0.0
          %1056 = vmatpush1.msra.mxu0 0.0
          %1057 = vmatprep.subr.mxu0 0.0
          %1058 = vmatpush1.msra.mxu0 0.0
          %1059 = vmatprep.subr.mxu0 0.0
          %1060 = vmatpush1.msra.mxu0 0.0
          %1061 = vmatprep.subr.mxu0 0.0
          %1062 = vmatpush1.msra.mxu0 0.0
          %1063 = vmatprep.subr.mxu0 0.0
          %1064 = vmatpush1.msra.mxu0 0.0
          %1065 = vmatprep.subr.mxu0 0.0
          %1066 = vmatpush1.msra.mxu0 0.0
          %v1067 = vand.u32 %v677, 4294901760
          %v1068 = vsub.f32 %v677, %v1067
          %v1069 = vand.u32 %v1068, 4294901760
          %1070 = vmatprep.subr.mxu0 %v1069
          %v1071 = vand.u32 %v676, 4294901760
          %v1072 = vsub.f32 %v676, %v1071
          %v1073 = vand.u32 %v1072, 4294901760
          %1074 = vmatpush1.msra.mxu0 %v1073
          %1075 = vmatprep.subr.mxu0 0.0
          %1076 = vmatpush2.msra.mxu0 0.0
          %1077 = vmatprep.subr.mxu0 0.0
          %1078 = vmatpush2.msra.mxu0 0.0
          %1079 = vmatprep.subr.mxu0 0.0
          %1080 = vmatpush2.msra.mxu0 0.0
          %1081 = vmatprep.subr.mxu0 0.0
          %1082 = vmatpush2.msra.mxu0 0.0
          %1083 = vmatprep.subr.mxu0 0.0
          %1084 = vmatpush2.msra.mxu0 0.0
          %1085 = vmatprep.subr.mxu0 0.0
          %1086 = vmatpush2.msra.mxu0 0.0
          %1087 = vmatprep.subr.mxu0 0.0
          %1088 = vmatpush2.msra.mxu0 0.0
          %1089 = vmatprep.subr.mxu0 0.0
          %1090 = vmatpush2.msra.mxu0 0.0
          %1091 = vmatprep.subr.mxu0 0.0
          %1092 = vmatpush2.msra.mxu0 0.0
          %1093 = vmatprep.subr.mxu0 0.0
          %1094 = vmatpush2.msra.mxu0 0.0
          %1095 = vmatprep.subr.mxu0 0.0
          %1096 = vmatpush2.msra.mxu0 0.0
          %1097 = vmatprep.subr.mxu0 0.0
          %1098 = vmatpush2.msra.mxu0 0.0
          %1099 = vmatprep.subr.mxu0 0.0
          %1100 = vmatpush2.msra.mxu0 0.0
          %1101 = vmatprep.subr.mxu0 0.0
          %1102 = vmatpush2.msra.mxu0 0.0
          %1103 = vmatprep.subr.mxu0 0.0
          %1104 = vmatpush2.msra.mxu0 0.0
          %1105 = vmatprep.subr.mxu0 0.0
          %1106 = vmatpush2.msra.mxu0 0.0
          %1107 = vmatprep.mubr.f32.mxu0 0.0
          %v1108 = vand.u32 %v722, 4294901760
          %1109 = vmatmul.mubr.f32.gmra.mxu0 %v1108
          %v1110 = vpop.f32.mrf.mxu0
          %v1111 = vadd.f32 %v1033, %v1110
          %v1112 = vpop.f32.mrf.mxu0
          %v1113 = vadd.f32 %v1035, %v1112
          %1114 = vdwg.mxu0
          %1115 = vmatprep.subr.mxu0 0.0
          %1116 = vmatpush1.msra.mxu0 0.0
          %1117 = vmatprep.subr.mxu0 0.0
          %1118 = vmatpush1.msra.mxu0 0.0
          %1119 = vmatprep.subr.mxu0 0.0
          %1120 = vmatpush1.msra.mxu0 0.0
          %1121 = vmatprep.subr.mxu0 0.0
          %1122 = vmatpush1.msra.mxu0 0.0
          %1123 = vmatprep.subr.mxu0 0.0
          %1124 = vmatpush1.msra.mxu0 0.0
          %1125 = vmatprep.subr.mxu0 0.0
          %1126 = vmatpush1.msra.mxu0 0.0
          %1127 = vmatprep.subr.mxu0 0.0
          %1128 = vmatpush1.msra.mxu0 0.0
          %1129 = vmatprep.subr.mxu0 0.0
          %1130 = vmatpush1.msra.mxu0 0.0
          %1131 = vmatprep.subr.mxu0 0.0
          %1132 = vmatpush1.msra.mxu0 0.0
          %1133 = vmatprep.subr.mxu0 0.0
          %1134 = vmatpush1.msra.mxu0 0.0
          %1135 = vmatprep.subr.mxu0 0.0
          %1136 = vmatpush1.msra.mxu0 0.0
          %1137 = vmatprep.subr.mxu0 0.0
          %1138 = vmatpush1.msra.mxu0 0.0
          %1139 = vmatprep.subr.mxu0 0.0
          %1140 = vmatpush1.msra.mxu0 0.0
          %1141 = vmatprep.subr.mxu0 0.0
          %1142 = vmatpush1.msra.mxu0 0.0
          %1143 = vmatprep.subr.mxu0 0.0
          %1144 = vmatpush1.msra.mxu0 0.0
          %v1145 = vand.u32 %v677, 4294901760
          %1146 = vmatprep.subr.mxu0 %v1145
          %v1147 = vand.u32 %v676, 4294901760
          %1148 = vmatpush1.msra.mxu0 %v1147
          %1149 = vmatprep.subr.mxu0 0.0
          %1150 = vmatpush2.msra.mxu0 0.0
          %1151 = vmatprep.subr.mxu0 0.0
          %1152 = vmatpush2.msra.mxu0 0.0
          %1153 = vmatprep.subr.mxu0 0.0
          %1154 = vmatpush2.msra.mxu0 0.0
          %1155 = vmatprep.subr.mxu0 0.0
          %1156 = vmatpush2.msra.mxu0 0.0
          %1157 = vmatprep.subr.mxu0 0.0
          %1158 = vmatpush2.msra.mxu0 0.0
          %1159 = vmatprep.subr.mxu0 0.0
          %1160 = vmatpush2.msra.mxu0 0.0
          %1161 = vmatprep.subr.mxu0 0.0
          %1162 = vmatpush2.msra.mxu0 0.0
          %1163 = vmatprep.subr.mxu0 0.0
          %1164 = vmatpush2.msra.mxu0 0.0
          %1165 = vmatprep.subr.mxu0 0.0
          %1166 = vmatpush2.msra.mxu0 0.0
          %1167 = vmatprep.subr.mxu0 0.0
          %1168 = vmatpush2.msra.mxu0 0.0
          %1169 = vmatprep.subr.mxu0 0.0
          %1170 = vmatpush2.msra.mxu0 0.0
          %1171 = vmatprep.subr.mxu0 0.0
          %1172 = vmatpush2.msra.mxu0 0.0
          %1173 = vmatprep.subr.mxu0 0.0
          %1174 = vmatpush2.msra.mxu0 0.0
          %1175 = vmatprep.subr.mxu0 0.0
          %1176 = vmatpush2.msra.mxu0 0.0
          %1177 = vmatprep.subr.mxu0 0.0
          %1178 = vmatpush2.msra.mxu0 0.0
          %1179 = vmatprep.subr.mxu0 0.0
          %1180 = vmatpush2.msra.mxu0 0.0
          %1181 = vmatprep.mubr.f32.mxu0 0.0
          %v1182 = vand.u32 %v722, 4294901760
          %1183 = vmatmul.mubr.f32.gmra.mxu0 %v1182
          %v1184 = vpop.f32.mrf.mxu0
          %v1185 = vadd.f32 %v1111, %v1184
          %v1186 = vpop.f32.mrf.mxu0
          %v1187 = vadd.f32 %v1113, %v1186
          %1188 = vdwg.mxu0
          %1189 = vmatprep.subr.mxu0 0.0
          %1190 = vmatpush1.msra.mxu0 0.0
          %1191 = vmatprep.subr.mxu0 0.0
          %1192 = vmatpush1.msra.mxu0 0.0
          %1193 = vmatprep.subr.mxu0 0.0
          %1194 = vmatpush1.msra.mxu0 0.0
          %1195 = vmatprep.subr.mxu0 0.0
          %1196 = vmatpush1.msra.mxu0 0.0
          %1197 = vmatprep.subr.mxu0 0.0
          %1198 = vmatpush1.msra.mxu0 0.0
          %1199 = vmatprep.subr.mxu0 0.0
          %1200 = vmatpush1.msra.mxu0 0.0
          %1201 = vmatprep.subr.mxu0 0.0
          %1202 = vmatpush1.msra.mxu0 0.0
          %1203 = vmatprep.subr.mxu0 0.0
          %1204 = vmatpush1.msra.mxu0 0.0
          %1205 = vmatprep.subr.mxu0 0.0
          %1206 = vmatpush1.msra.mxu0 0.0
          %1207 = vmatprep.subr.mxu0 0.0
          %1208 = vmatpush1.msra.mxu0 0.0
          %1209 = vmatprep.subr.mxu0 0.0
          %1210 = vmatpush1.msra.mxu0 0.0
          %1211 = vmatprep.subr.mxu0 0.0
          %1212 = vmatpush1.msra.mxu0 0.0
          %1213 = vmatprep.subr.mxu0 0.0
          %1214 = vmatpush1.msra.mxu0 0.0
          %1215 = vmatprep.subr.mxu0 0.0
          %1216 = vmatpush1.msra.mxu0 0.0
          %1217 = vmatprep.subr.mxu0 0.0
          %1218 = vmatpush1.msra.mxu0 0.0
          %v1219 = vand.u32 %v679, 4294901760
          %1220 = vmatprep.subr.mxu0 %v1219
          %v1221 = vand.u32 %v678, 4294901760
          %1222 = vmatpush1.msra.mxu0 %v1221
          %1223 = vmatprep.subr.mxu0 0.0
          %1224 = vmatpush2.msra.mxu0 0.0
          %1225 = vmatprep.subr.mxu0 0.0
          %1226 = vmatpush2.msra.mxu0 0.0
          %1227 = vmatprep.subr.mxu0 0.0
          %1228 = vmatpush2.msra.mxu0 0.0
          %1229 = vmatprep.subr.mxu0 0.0
          %1230 = vmatpush2.msra.mxu0 0.0
          %1231 = vmatprep.subr.mxu0 0.0
          %1232 = vmatpush2.msra.mxu0 0.0
          %1233 = vmatprep.subr.mxu0 0.0
          %1234 = vmatpush2.msra.mxu0 0.0
          %1235 = vmatprep.subr.mxu0 0.0
          %1236 = vmatpush2.msra.mxu0 0.0
          %1237 = vmatprep.subr.mxu0 0.0
          %1238 = vmatpush2.msra.mxu0 0.0
          %1239 = vmatprep.subr.mxu0 0.0
          %1240 = vmatpush2.msra.mxu0 0.0
          %1241 = vmatprep.subr.mxu0 0.0
          %1242 = vmatpush2.msra.mxu0 0.0
          %1243 = vmatprep.subr.mxu0 0.0
          %1244 = vmatpush2.msra.mxu0 0.0
          %1245 = vmatprep.subr.mxu0 0.0
          %1246 = vmatpush2.msra.mxu0 0.0
          %1247 = vmatprep.subr.mxu0 0.0
          %1248 = vmatpush2.msra.mxu0 0.0
          %1249 = vmatprep.subr.mxu0 0.0
          %1250 = vmatpush2.msra.mxu0 0.0
          %1251 = vmatprep.subr.mxu0 0.0
          %1252 = vmatpush2.msra.mxu0 0.0
          %1253 = vmatprep.subr.mxu0 0.0
          %1254 = vmatpush2.msra.mxu0 0.0
          %1255 = vmatprep.mubr.f32.mxu0 0.0
          %v1256 = vand.u32 %v722, 4294901760
          %v1257 = vsub.f32 %v722, %v1256
          %v1258 = vand.u32 %v1257, 4294901760
          %v1259 = vsub.f32 %v1257, %v1258
          %v1260 = vand.u32 %v1259, 4294901760
          %1261 = vmatmul.mubr.f32.gmra.mxu0 %v1260
          %v1262 = vpop.f32.mrf.mxu0
          %v1263 = vadd.f32 0.0, %v1262
          %v1264 = vpop.f32.mrf.mxu0
          %v1265 = vadd.f32 0.0, %v1264
          %1266 = vdwg.mxu0
          %1267 = vmatprep.subr.mxu0 0.0
          %1268 = vmatpush1.msra.mxu0 0.0
          %1269 = vmatprep.subr.mxu0 0.0
          %1270 = vmatpush1.msra.mxu0 0.0
          %1271 = vmatprep.subr.mxu0 0.0
          %1272 = vmatpush1.msra.mxu0 0.0
          %1273 = vmatprep.subr.mxu0 0.0
          %1274 = vmatpush1.msra.mxu0 0.0
          %1275 = vmatprep.subr.mxu0 0.0
          %1276 = vmatpush1.msra.mxu0 0.0
          %1277 = vmatprep.subr.mxu0 0.0
          %1278 = vmatpush1.msra.mxu0 0.0
          %1279 = vmatprep.subr.mxu0 0.0
          %1280 = vmatpush1.msra.mxu0 0.0
          %1281 = vmatprep.subr.mxu0 0.0
          %1282 = vmatpush1.msra.mxu0 0.0
          %1283 = vmatprep.subr.mxu0 0.0
          %1284 = vmatpush1.msra.mxu0 0.0
          %1285 = vmatprep.subr.mxu0 0.0
          %1286 = vmatpush1.msra.mxu0 0.0
          %1287 = vmatprep.subr.mxu0 0.0
          %1288 = vmatpush1.msra.mxu0 0.0
          %1289 = vmatprep.subr.mxu0 0.0
          %1290 = vmatpush1.msra.mxu0 0.0
          %1291 = vmatprep.subr.mxu0 0.0
          %1292 = vmatpush1.msra.mxu0 0.0
          %1293 = vmatprep.subr.mxu0 0.0
          %1294 = vmatpush1.msra.mxu0 0.0
          %1295 = vmatprep.subr.mxu0 0.0
          %1296 = vmatpush1.msra.mxu0 0.0
          %v1297 = vand.u32 %v679, 4294901760
          %v1298 = vsub.f32 %v679, %v1297
          %v1299 = vand.u32 %v1298, 4294901760
          %v1300 = vsub.f32 %v1298, %v1299
          %v1301 = vand.u32 %v1300, 4294901760
          %1302 = vmatprep.subr.mxu0 %v1301
          %v1303 = vand.u32 %v678, 4294901760
          %v1304 = vsub.f32 %v678, %v1303
          %v1305 = vand.u32 %v1304, 4294901760
          %v1306 = vsub.f32 %v1304, %v1305
          %v1307 = vand.u32 %v1306, 4294901760
          %1308 = vmatpush1.msra.mxu0 %v1307
          %1309 = vmatprep.subr.mxu0 0.0
          %1310 = vmatpush2.msra.mxu0 0.0
          %1311 = vmatprep.subr.mxu0 0.0
          %1312 = vmatpush2.msra.mxu0 0.0
          %1313 = vmatprep.subr.mxu0 0.0
          %1314 = vmatpush2.msra.mxu0 0.0
          %1315 = vmatprep.subr.mxu0 0.0
          %1316 = vmatpush2.msra.mxu0 0.0
          %1317 = vmatprep.subr.mxu0 0.0
          %1318 = vmatpush2.msra.mxu0 0.0
          %1319 = vmatprep.subr.mxu0 0.0
          %1320 = vmatpush2.msra.mxu0 0.0
          %1321 = vmatprep.subr.mxu0 0.0
          %1322 = vmatpush2.msra.mxu0 0.0
          %1323 = vmatprep.subr.mxu0 0.0
          %1324 = vmatpush2.msra.mxu0 0.0
          %1325 = vmatprep.subr.mxu0 0.0
          %1326 = vmatpush2.msra.mxu0 0.0
          %1327 = vmatprep.subr.mxu0 0.0
          %1328 = vmatpush2.msra.mxu0 0.0
          %1329 = vmatprep.subr.mxu0 0.0
          %1330 = vmatpush2.msra.mxu0 0.0
          %1331 = vmatprep.subr.mxu0 0.0
          %1332 = vmatpush2.msra.mxu0 0.0
          %1333 = vmatprep.subr.mxu0 0.0
          %1334 = vmatpush2.msra.mxu0 0.0
          %1335 = vmatprep.subr.mxu0 0.0
          %1336 = vmatpush2.msra.mxu0 0.0
          %1337 = vmatprep.subr.mxu0 0.0
          %1338 = vmatpush2.msra.mxu0 0.0
          %1339 = vmatprep.subr.mxu0 0.0
          %1340 = vmatpush2.msra.mxu0 0.0
          %1341 = vmatprep.mubr.f32.mxu0 0.0
          %v1342 = vand.u32 %v722, 4294901760
          %1343 = vmatmul.mubr.f32.gmra.mxu0 %v1342
          %v1344 = vpop.f32.mrf.mxu0
          %v1345 = vadd.f32 %v1263, %v1344
          %v1346 = vpop.f32.mrf.mxu0
          %v1347 = vadd.f32 %v1265, %v1346
          %1348 = vdwg.mxu0
          %1349 = vmatprep.subr.mxu0 0.0
          %1350 = vmatpush1.msra.mxu0 0.0
          %1351 = vmatprep.subr.mxu0 0.0
          %1352 = vmatpush1.msra.mxu0 0.0
          %1353 = vmatprep.subr.mxu0 0.0
          %1354 = vmatpush1.msra.mxu0 0.0
          %1355 = vmatprep.subr.mxu0 0.0
          %1356 = vmatpush1.msra.mxu0 0.0
          %1357 = vmatprep.subr.mxu0 0.0
          %1358 = vmatpush1.msra.mxu0 0.0
          %1359 = vmatprep.subr.mxu0 0.0
          %1360 = vmatpush1.msra.mxu0 0.0
          %1361 = vmatprep.subr.mxu0 0.0
          %1362 = vmatpush1.msra.mxu0 0.0
          %1363 = vmatprep.subr.mxu0 0.0
          %1364 = vmatpush1.msra.mxu0 0.0
          %1365 = vmatprep.subr.mxu0 0.0
          %1366 = vmatpush1.msra.mxu0 0.0
          %1367 = vmatprep.subr.mxu0 0.0
          %1368 = vmatpush1.msra.mxu0 0.0
          %1369 = vmatprep.subr.mxu0 0.0
          %1370 = vmatpush1.msra.mxu0 0.0
          %1371 = vmatprep.subr.mxu0 0.0
          %1372 = vmatpush1.msra.mxu0 0.0
          %1373 = vmatprep.subr.mxu0 0.0
          %1374 = vmatpush1.msra.mxu0 0.0
          %1375 = vmatprep.subr.mxu0 0.0
          %1376 = vmatpush1.msra.mxu0 0.0
          %1377 = vmatprep.subr.mxu0 0.0
          %1378 = vmatpush1.msra.mxu0 0.0
          %v1379 = vand.u32 %v679, 4294901760
          %v1380 = vsub.f32 %v679, %v1379
          %1381 = vmatprep.subr.mxu0 %v1380
          %v1382 = vand.u32 %v678, 4294901760
          %v1383 = vsub.f32 %v678, %v1382
          %1384 = vmatpush1.msra.mxu0 %v1383
          %1385 = vmatprep.subr.mxu0 0.0
          %1386 = vmatpush2.msra.mxu0 0.0
          %1387 = vmatprep.subr.mxu0 0.0
          %1388 = vmatpush2.msra.mxu0 0.0
          %1389 = vmatprep.subr.mxu0 0.0
          %1390 = vmatpush2.msra.mxu0 0.0
          %1391 = vmatprep.subr.mxu0 0.0
          %1392 = vmatpush2.msra.mxu0 0.0
          %1393 = vmatprep.subr.mxu0 0.0
          %1394 = vmatpush2.msra.mxu0 0.0
          %1395 = vmatprep.subr.mxu0 0.0
          %1396 = vmatpush2.msra.mxu0 0.0
          %1397 = vmatprep.subr.mxu0 0.0
          %1398 = vmatpush2.msra.mxu0 0.0
          %1399 = vmatprep.subr.mxu0 0.0
          %1400 = vmatpush2.msra.mxu0 0.0
          %1401 = vmatprep.subr.mxu0 0.0
          %1402 = vmatpush2.msra.mxu0 0.0
          %1403 = vmatprep.subr.mxu0 0.0
          %1404 = vmatpush2.msra.mxu0 0.0
          %1405 = vmatprep.subr.mxu0 0.0
          %1406 = vmatpush2.msra.mxu0 0.0
          %1407 = vmatprep.subr.mxu0 0.0
          %1408 = vmatpush2.msra.mxu0 0.0
          %1409 = vmatprep.subr.mxu0 0.0
          %1410 = vmatpush2.msra.mxu0 0.0
          %1411 = vmatprep.subr.mxu0 0.0
          %1412 = vmatpush2.msra.mxu0 0.0
          %1413 = vmatprep.subr.mxu0 0.0
          %1414 = vmatpush2.msra.mxu0 0.0
          %1415 = vmatprep.subr.mxu0 0.0
          %1416 = vmatpush2.msra.mxu0 0.0
          %1417 = vmatprep.mubr.f32.mxu0 0.0
          %v1418 = vand.u32 %v722, 4294901760
          %v1419 = vsub.f32 %v722, %v1418
          %1420 = vmatmul.mubr.f32.gmra.mxu0 %v1419
          %v1421 = vpop.f32.mrf.mxu0
          %v1422 = vadd.f32 %v1345, %v1421
          %v1423 = vpop.f32.mrf.mxu0
          %v1424 = vadd.f32 %v1347, %v1423
          %1425 = vdwg.mxu0
          %1426 = vmatprep.subr.mxu0 0.0
          %1427 = vmatpush1.msra.mxu0 0.0
          %1428 = vmatprep.subr.mxu0 0.0
          %1429 = vmatpush1.msra.mxu0 0.0
          %1430 = vmatprep.subr.mxu0 0.0
          %1431 = vmatpush1.msra.mxu0 0.0
          %1432 = vmatprep.subr.mxu0 0.0
          %1433 = vmatpush1.msra.mxu0 0.0
          %1434 = vmatprep.subr.mxu0 0.0
          %1435 = vmatpush1.msra.mxu0 0.0
          %1436 = vmatprep.subr.mxu0 0.0
          %1437 = vmatpush1.msra.mxu0 0.0
          %1438 = vmatprep.subr.mxu0 0.0
          %1439 = vmatpush1.msra.mxu0 0.0
          %1440 = vmatprep.subr.mxu0 0.0
          %1441 = vmatpush1.msra.mxu0 0.0
          %1442 = vmatprep.subr.mxu0 0.0
          %1443 = vmatpush1.msra.mxu0 0.0
          %1444 = vmatprep.subr.mxu0 0.0
          %1445 = vmatpush1.msra.mxu0 0.0
          %1446 = vmatprep.subr.mxu0 0.0
          %1447 = vmatpush1.msra.mxu0 0.0
          %1448 = vmatprep.subr.mxu0 0.0
          %1449 = vmatpush1.msra.mxu0 0.0
          %1450 = vmatprep.subr.mxu0 0.0
          %1451 = vmatpush1.msra.mxu0 0.0
          %1452 = vmatprep.subr.mxu0 0.0
          %1453 = vmatpush1.msra.mxu0 0.0
          %1454 = vmatprep.subr.mxu0 0.0
          %1455 = vmatpush1.msra.mxu0 0.0
          %v1456 = vand.u32 %v679, 4294901760
          %1457 = vmatprep.subr.mxu0 %v1456
          %v1458 = vand.u32 %v678, 4294901760
          %1459 = vmatpush1.msra.mxu0 %v1458
          %1460 = vmatprep.subr.mxu0 0.0
          %1461 = vmatpush2.msra.mxu0 0.0
          %1462 = vmatprep.subr.mxu0 0.0
          %1463 = vmatpush2.msra.mxu0 0.0
          %1464 = vmatprep.subr.mxu0 0.0
          %1465 = vmatpush2.msra.mxu0 0.0
          %1466 = vmatprep.subr.mxu0 0.0
          %1467 = vmatpush2.msra.mxu0 0.0
          %1468 = vmatprep.subr.mxu0 0.0
          %1469 = vmatpush2.msra.mxu0 0.0
          %1470 = vmatprep.subr.mxu0 0.0
          %1471 = vmatpush2.msra.mxu0 0.0
          %1472 = vmatprep.subr.mxu0 0.0
          %1473 = vmatpush2.msra.mxu0 0.0
          %1474 = vmatprep.subr.mxu0 0.0
          %1475 = vmatpush2.msra.mxu0 0.0
          %1476 = vmatprep.subr.mxu0 0.0
          %1477 = vmatpush2.msra.mxu0 0.0
          %1478 = vmatprep.subr.mxu0 0.0
          %1479 = vmatpush2.msra.mxu0 0.0
          %1480 = vmatprep.subr.mxu0 0.0
          %1481 = vmatpush2.msra.mxu0 0.0
          %1482 = vmatprep.subr.mxu0 0.0
          %1483 = vmatpush2.msra.mxu0 0.0
          %1484 = vmatprep.subr.mxu0 0.0
          %1485 = vmatpush2.msra.mxu0 0.0
          %1486 = vmatprep.subr.mxu0 0.0
          %1487 = vmatpush2.msra.mxu0 0.0
          %1488 = vmatprep.subr.mxu0 0.0
          %1489 = vmatpush2.msra.mxu0 0.0
          %1490 = vmatprep.subr.mxu0 0.0
          %1491 = vmatpush2.msra.mxu0 0.0
          %1492 = vmatprep.mubr.f32.mxu0 0.0
          %v1493 = vand.u32 %v722, 4294901760
          %v1494 = vsub.f32 %v722, %v1493
          %v1495 = vand.u32 %v1494, 4294901760
          %1496 = vmatmul.mubr.f32.gmra.mxu0 %v1495
          %v1497 = vpop.f32.mrf.mxu0
          %v1498 = vadd.f32 %v1422, %v1497
          %v1499 = vpop.f32.mrf.mxu0
          %v1500 = vadd.f32 %v1424, %v1499
          %1501 = vdwg.mxu0
          %1502 = vmatprep.subr.mxu0 0.0
          %1503 = vmatpush1.msra.mxu0 0.0
          %1504 = vmatprep.subr.mxu0 0.0
          %1505 = vmatpush1.msra.mxu0 0.0
          %1506 = vmatprep.subr.mxu0 0.0
          %1507 = vmatpush1.msra.mxu0 0.0
          %1508 = vmatprep.subr.mxu0 0.0
          %1509 = vmatpush1.msra.mxu0 0.0
          %1510 = vmatprep.subr.mxu0 0.0
          %1511 = vmatpush1.msra.mxu0 0.0
          %1512 = vmatprep.subr.mxu0 0.0
          %1513 = vmatpush1.msra.mxu0 0.0
          %1514 = vmatprep.subr.mxu0 0.0
          %1515 = vmatpush1.msra.mxu0 0.0
          %1516 = vmatprep.subr.mxu0 0.0
          %1517 = vmatpush1.msra.mxu0 0.0
          %1518 = vmatprep.subr.mxu0 0.0
          %1519 = vmatpush1.msra.mxu0 0.0
          %1520 = vmatprep.subr.mxu0 0.0
          %1521 = vmatpush1.msra.mxu0 0.0
          %1522 = vmatprep.subr.mxu0 0.0
          %1523 = vmatpush1.msra.mxu0 0.0
          %1524 = vmatprep.subr.mxu0 0.0
          %1525 = vmatpush1.msra.mxu0 0.0
          %1526 = vmatprep.subr.mxu0 0.0
          %1527 = vmatpush1.msra.mxu0 0.0
          %1528 = vmatprep.subr.mxu0 0.0
          %1529 = vmatpush1.msra.mxu0 0.0
          %1530 = vmatprep.subr.mxu0 0.0
          %1531 = vmatpush1.msra.mxu0 0.0
          %v1532 = vand.u32 %v679, 4294901760
          %v1533 = vsub.f32 %v679, %v1532
          %v1534 = vand.u32 %v1533, 4294901760
          %1535 = vmatprep.subr.mxu0 %v1534
          %v1536 = vand.u32 %v678, 4294901760
          %v1537 = vsub.f32 %v678, %v1536
          %v1538 = vand.u32 %v1537, 4294901760
          %1539 = vmatpush1.msra.mxu0 %v1538
          %1540 = vmatprep.subr.mxu0 0.0
          %1541 = vmatpush2.msra.mxu0 0.0
          %1542 = vmatprep.subr.mxu0 0.0
          %1543 = vmatpush2.msra.mxu0 0.0
          %1544 = vmatprep.subr.mxu0 0.0
          %1545 = vmatpush2.msra.mxu0 0.0
          %1546 = vmatprep.subr.mxu0 0.0
          %1547 = vmatpush2.msra.mxu0 0.0
          %1548 = vmatprep.subr.mxu0 0.0
          %1549 = vmatpush2.msra.mxu0 0.0
          %1550 = vmatprep.subr.mxu0 0.0
          %1551 = vmatpush2.msra.mxu0 0.0
          %1552 = vmatprep.subr.mxu0 0.0
          %1553 = vmatpush2.msra.mxu0 0.0
          %1554 = vmatprep.subr.mxu0 0.0
          %1555 = vmatpush2.msra.mxu0 0.0
          %1556 = vmatprep.subr.mxu0 0.0
          %1557 = vmatpush2.msra.mxu0 0.0
          %1558 = vmatprep.subr.mxu0 0.0
          %1559 = vmatpush2.msra.mxu0 0.0
          %1560 = vmatprep.subr.mxu0 0.0
          %1561 = vmatpush2.msra.mxu0 0.0
          %1562 = vmatprep.subr.mxu0 0.0
          %1563 = vmatpush2.msra.mxu0 0.0
          %1564 = vmatprep.subr.mxu0 0.0
          %1565 = vmatpush2.msra.mxu0 0.0
          %1566 = vmatprep.subr.mxu0 0.0
          %1567 = vmatpush2.msra.mxu0 0.0
          %1568 = vmatprep.subr.mxu0 0.0
          %1569 = vmatpush2.msra.mxu0 0.0
          %1570 = vmatprep.subr.mxu0 0.0
          %1571 = vmatpush2.msra.mxu0 0.0
          %1572 = vmatprep.mubr.f32.mxu0 0.0
          %v1573 = vand.u32 %v722, 4294901760
          %1574 = vmatmul.mubr.f32.gmra.mxu0 %v1573
          %v1575 = vpop.f32.mrf.mxu0
          %v1576 = vadd.f32 %v1498, %v1575
          %v1577 = vpop.f32.mrf.mxu0
          %v1578 = vadd.f32 %v1500, %v1577
          %1579 = vdwg.mxu0
          %1580 = vmatprep.subr.mxu0 0.0
          %1581 = vmatpush1.msra.mxu0 0.0
          %1582 = vmatprep.subr.mxu0 0.0
          %1583 = vmatpush1.msra.mxu0 0.0
          %1584 = vmatprep.subr.mxu0 0.0
          %1585 = vmatpush1.msra.mxu0 0.0
          %1586 = vmatprep.subr.mxu0 0.0
          %1587 = vmatpush1.msra.mxu0 0.0
          %1588 = vmatprep.subr.mxu0 0.0
          %1589 = vmatpush1.msra.mxu0 0.0
          %1590 = vmatprep.subr.mxu0 0.0
          %1591 = vmatpush1.msra.mxu0 0.0
          %1592 = vmatprep.subr.mxu0 0.0
          %1593 = vmatpush1.msra.mxu0 0.0
          %1594 = vmatprep.subr.mxu0 0.0
          %1595 = vmatpush1.msra.mxu0 0.0
          %1596 = vmatprep.subr.mxu0 0.0
          %1597 = vmatpush1.msra.mxu0 0.0
          %1598 = vmatprep.subr.mxu0 0.0
          %1599 = vmatpush1.msra.mxu0 0.0
          %1600 = vmatprep.subr.mxu0 0.0
          %1601 = vmatpush1.msra.mxu0 0.0
          %1602 = vmatprep.subr.mxu0 0.0
          %1603 = vmatpush1.msra.mxu0 0.0
          %1604 = vmatprep.subr.mxu0 0.0
          %1605 = vmatpush1.msra.mxu0 0.0
          %1606 = vmatprep.subr.mxu0 0.0
          %1607 = vmatpush1.msra.mxu0 0.0
          %1608 = vmatprep.subr.mxu0 0.0
          %1609 = vmatpush1.msra.mxu0 0.0
          %v1610 = vand.u32 %v679, 4294901760
          %1611 = vmatprep.subr.mxu0 %v1610
          %v1612 = vand.u32 %v678, 4294901760
          %1613 = vmatpush1.msra.mxu0 %v1612
          %1614 = vmatprep.subr.mxu0 0.0
          %1615 = vmatpush2.msra.mxu0 0.0
          %1616 = vmatprep.subr.mxu0 0.0
          %1617 = vmatpush2.msra.mxu0 0.0
          %1618 = vmatprep.subr.mxu0 0.0
          %1619 = vmatpush2.msra.mxu0 0.0
          %1620 = vmatprep.subr.mxu0 0.0
          %1621 = vmatpush2.msra.mxu0 0.0
          %1622 = vmatprep.subr.mxu0 0.0
          %1623 = vmatpush2.msra.mxu0 0.0
          %1624 = vmatprep.subr.mxu0 0.0
          %1625 = vmatpush2.msra.mxu0 0.0
          %1626 = vmatprep.subr.mxu0 0.0
          %1627 = vmatpush2.msra.mxu0 0.0
          %1628 = vmatprep.subr.mxu0 0.0
          %1629 = vmatpush2.msra.mxu0 0.0
          %1630 = vmatprep.subr.mxu0 0.0
          %1631 = vmatpush2.msra.mxu0 0.0
          %1632 = vmatprep.subr.mxu0 0.0
          %1633 = vmatpush2.msra.mxu0 0.0
          %1634 = vmatprep.subr.mxu0 0.0
          %1635 = vmatpush2.msra.mxu0 0.0
          %1636 = vmatprep.subr.mxu0 0.0
          %1637 = vmatpush2.msra.mxu0 0.0
          %1638 = vmatprep.subr.mxu0 0.0
          %1639 = vmatpush2.msra.mxu0 0.0
          %1640 = vmatprep.subr.mxu0 0.0
          %1641 = vmatpush2.msra.mxu0 0.0
          %1642 = vmatprep.subr.mxu0 0.0
          %1643 = vmatpush2.msra.mxu0 0.0
          %1644 = vmatprep.subr.mxu0 0.0
          %1645 = vmatpush2.msra.mxu0 0.0
          %1646 = vmatprep.mubr.f32.mxu0 0.0
          %v1647 = vand.u32 %v722, 4294901760
          %1648 = vmatmul.mubr.f32.gmra.mxu0 %v1647
          %v1649 = vpop.f32.mrf.mxu0
          %v1650 = vadd.f32 %v1576, %v1649
          %v1651 = vpop.f32.mrf.mxu0
          %v1652 = vadd.f32 %v1578, %v1651
          %1653 = vdwg.mxu0
          %vm1654 = vcmp.lt.f32.partialorder %v664, 0.5
          %vm1655 = vcmp.lt.f32.partialorder %v665, 0.5
          %vm1656 = vcmp.lt.f32.partialorder %v666, 0.5
          %vm1657 = vcmp.lt.f32.partialorder %v667, 0.5
          %v1658 = vadd.f32 %v1185, 1.0
          %v1659 = vadd.f32 %v1187, 1.0
          %v1660 = vadd.f32 %v1650, 1.0
          %v1661 = vadd.f32 %v1652, 1.0
          %v1662 = vsel %vm1654, 0.0, %v1658
          %v1663 = vsel %vm1655, 0.0, %v1659
          %v1664 = vsel %vm1656, 0.0, %v1660
          %v1665 = vsel %vm1657, 0.0, %v1661
          %v1670 = vcombine.high %v1662, %v1663
          %v1671 = vcombine.high %v1664, %v1665
          %v1673 = vunpack.c.l.s4 1966171168
          %v1674 = vunpack.c.0.s8 %v1673
          %v1675 = vlaneseq
          %v1676 = vshrl.u32 %v1675, 7
          %v1677 = vsub.s32 %v1674, %v1676
          %v1678 = vrot.slane %v1670, %v1677
          %v1680 = vunpack.c.l.s4 1966171168
          %v1681 = vunpack.c.0.s8 %v1680
          %v1682 = vlaneseq
          %v1683 = vshrl.u32 %v1682, 7
          %v1684 = vsub.s32 %v1681, %v1683
          %v1685 = vrot.slane %v1671, %v1684
          %v1686 = vcombine.low %v1678, %v1685
          %v1688 = vunpack.c.l.s4 1966171168
          %v1689 = vunpack.c.0.s8 %v1688
          %v1690 = vlaneseq
          %v1691 = vshrl.u32 %v1690, 7
          %v1692 = vsub.s32 %v1689, %v1691
          %v1693 = vrot.slane %v1686, %v1692
          %v1695 = vlaneseq
          %vm1696 = vcmp.ge.s32.totalorder %v1695, 0
          %vm1697 = vcmp.lt.s32.totalorder %v1695, 512
          %vm1698 = vmand %vm1696, %vm1697
          %1699 = vst.msk [vmem:[%s279] sm:$0xf] %vm1698, %v1693
          %v1700 = vmax.f32 %v294, 1e-12
          %v1701 = vmax.f32 %v295, 1e-12
          %v1702 = vmax.f32 %v296, 1e-12
          %v1703 = vmax.f32 %v297, 1e-12
          %v1708 = vrot.slane %v1185, 2
          %v1709 = vrot.slane %v1187, 2
          %v1710 = vrot.slane %v1650, 2
          %v1711 = vrot.slane %v1652, 2
          %v1716 = vadd.f32 %v1185, %v1708
          %v1717 = vadd.f32 %v1187, %v1709
          %v1718 = vadd.f32 %v1650, %v1710
          %v1719 = vadd.f32 %v1652, %v1711
          %v1720 = vmul.f32 %v1716, 0.5
          %v1721 = vmul.f32 %v1717, 0.5
          %v1722 = vmul.f32 %v1718, 0.5
          %v1723 = vmul.f32 %v1719, 0.5
          %v1724 = vsub.f32 %v1720, %v294
          %v1725 = vsub.f32 %v1721, %v295
          %v1726 = vsub.f32 %v1722, %v296
          %v1727 = vsub.f32 %v1723, %v297
          %v1728 = vmul.f32 %v1700, 0.1
          %v1729 = vmul.f32 %v1701, 0.1
          %v1730 = vmul.f32 %v1702, 0.1
          %v1731 = vmul.f32 %v1703, 0.1
          %v1736 = vrot.slane %v1728, 2
          %v1737 = vrot.slane %v1729, 2
          %v1738 = vrot.slane %v1730, 2
          %v1739 = vrot.slane %v1731, 2
          %v1744 = vrcp.pop %v1736
          %v1745 = vmul.f32 %v1724, %v1744
          %v1746 = vrcp.pop %v1737
          %v1747 = vmul.f32 %v1725, %v1746
          %v1748 = vrcp.pop %v1738
          %v1749 = vmul.f32 %v1726, %v1748
          %v1750 = vrcp.pop %v1739
          %v1751 = vmul.f32 %v1727, %v1750
          %v1756 = vcombine.low %v1745, %v1747
          %v1757 = vcombine.low %v1749, %v1751
          %v1759 = vunpack.c.l.s4 1966171168
          %v1760 = vunpack.c.0.s8 %v1759
          %v1761 = vlaneseq
          %v1762 = vshrl.u32 %v1761, 7
          %v1763 = vsub.s32 %v1760, %v1762
          %v1764 = vrot.slane %v1756, %v1763
          %v1766 = vunpack.c.l.s4 1966171168
          %v1767 = vunpack.c.0.s8 %v1766
          %v1768 = vlaneseq
          %v1769 = vshrl.u32 %v1768, 7
          %v1770 = vsub.s32 %v1767, %v1769
          %v1771 = vrot.slane %v1757, %v1770
          %v1772 = vcombine.low %v1764, %v1771
          %v1774 = vunpack.c.l.s4 1966171168
          %v1775 = vunpack.c.0.s8 %v1774
          %v1776 = vlaneseq
          %v1777 = vshrl.u32 %v1776, 7
          %v1778 = vsub.s32 %v1775, %v1777
          %v1779 = vrot.slane %v1772, %v1778
          %1781 = vst.msk [vmem:[%s272] ss:$4 sm:$0xf] %vm1698, %v1779
          %v1782 = vcombine.high %v1764, %v1771
          %v1784 = vunpack.c.l.s4 1966171168
          %v1785 = vunpack.c.0.s8 %v1784
          %v1786 = vlaneseq
          %v1787 = vshrl.u32 %v1786, 7
          %v1788 = vsub.s32 %v1785, %v1787
          %v1789 = vrot.slane %v1782, %v1788
          %s1791 = scalar_lea.vmem %s272, 1 [#allocation7]
          %1792 = vst.msk [vmem:[%s1791] ss:$4 sm:$0xf] %vm1698, %v1789
          %v1793 = vrot.slane %v1185, 6
          %v1794 = vrot.slane %v1187, 6
          %v1795 = vrot.slane %v1650, 6
          %v1796 = vrot.slane %v1652, 6
          %v1801 = vsub.f32 %v1185, %v1793
          %v1802 = vsub.f32 %v1187, %v1794
          %v1803 = vsub.f32 %v1650, %v1795
          %v1804 = vsub.f32 %v1652, %v1796
          %v1805 = vmax.f32 %v1801, 1e-12
          %v1806 = vmax.f32 %v1802, 1e-12
          %v1807 = vmax.f32 %v1803, 1e-12
          %v1808 = vmax.f32 %v1804, 1e-12
          %v1809 = vrcp.pop %v1700
          %v1810 = vmul.f32 %v1805, %v1809
          %v1811 = vrcp.pop %v1701
          %v1812 = vmul.f32 %v1806, %v1811
          %v1813 = vrcp.pop %v1702
          %v1814 = vmul.f32 %v1807, %v1813
          %v1815 = vrcp.pop %v1703
          %v1816 = vmul.f32 %v1808, %v1815
          %v1817 = vlog2.pop %v1810
          %v1818 = vmul.f32 %v1817, 0.6931472
          %v1819 = vlog2.pop %v1812
          %v1820 = vmul.f32 %v1819, 0.6931472
          %v1821 = vlog2.pop %v1814
          %v1822 = vmul.f32 %v1821, 0.6931472
          %v1823 = vlog2.pop %v1816
          %v1824 = vmul.f32 %v1823, 0.6931472
          %v1825 = vrcp.pop 0.2
          %v1826 = vmul.f32 %v1818, %v1825
          %v1827 = vmul.f32 %v1820, %v1825
          %v1828 = vmul.f32 %v1822, %v1825
          %v1829 = vmul.f32 %v1824, %v1825
          %v1834 = vcombine.low %v1826, %v1827
          %v1835 = vcombine.low %v1828, %v1829
          %v1837 = vunpack.c.l.s4 1966171168
          %v1838 = vunpack.c.0.s8 %v1837
          %v1839 = vlaneseq
          %v1840 = vshrl.u32 %v1839, 7
          %v1841 = vsub.s32 %v1838, %v1840
          %v1842 = vrot.slane %v1834, %v1841
          %v1844 = vunpack.c.l.s4 1966171168
          %v1845 = vunpack.c.0.s8 %v1844
          %v1846 = vlaneseq
          %v1847 = vshrl.u32 %v1846, 7
          %v1848 = vsub.s32 %v1845, %v1847
          %v1849 = vrot.slane %v1835, %v1848
          %v1850 = vcombine.low %v1842, %v1849
          %v1852 = vunpack.c.l.s4 1966171168
          %v1853 = vunpack.c.0.s8 %v1852
          %v1854 = vlaneseq
          %v1855 = vshrl.u32 %v1854, 7
          %v1856 = vsub.s32 %v1853, %v1855
          %v1857 = vrot.slane %v1850, %v1856
          %v1858 = vcombine.high %v1857, %v1857
          %s1860 = scalar_lea.vmem %s272, 2 [#allocation7]
          %1861 = vst.msk [vmem:[%s1860] ss:$4 sm:$0xf] %vm1698, %v1858
          %v1862 = vcombine.high %v1842, %v1849
          %v1864 = vunpack.c.l.s4 1966171168
          %v1865 = vunpack.c.0.s8 %v1864
          %v1866 = vlaneseq
          %v1867 = vshrl.u32 %v1866, 7
          %v1868 = vsub.s32 %v1865, %v1867
          %v1869 = vrot.slane %v1862, %v1868
          %v1870 = vcombine.high %v1869, %v1869
          %s1872 = scalar_lea.vmem %s272, 3 [#allocation7]
          %1873 = vst.msk [vmem:[%s1872] ss:$4 sm:$0xf] %vm1698, %v1870
        $region48: #{tpu_custom_call.1} parent=31 // pred_fallthru
          _
        %s1874 = sand.u32 %s134, 1
        %s1875 = scalar_lea.sflag [#allocation6], %s1874
        %s1876 = sand.u32 %s134, 1
        %s1877 = smul.addr %s1876, 16
        %s1878 = scalar_lea.vmem [#allocation7], %s1877
        %s1879 = sand.u32 %s164, 1
        %s1880 = scalar_lea.sflag [#allocation9], %s1879
        %s1881 = sand.u32 %s164, 1
        %s1882 = smul.addr %s1881, 4
        %s1883 = scalar_lea.vmem [#allocation8], %s1882
        // Predicated region
        $region49: #{tpu_custom_call.1} parent=31 // pred_check
          %p1884 = pneg %p144
        $region50: #{tpu_custom_call.1} parent=31 // pred_check_branch
          %1886 = sbr.rel (%p1884) target = $region52
        $region51: #{tpu_custom_call.1} parent=31 // pred_region
          %s1887 = smul.u32 %s32, %s31
          %s1888 = smul.u32 4, %s1887
          %s1890 = ssub.s32 256, 256
          %1891 = vsyncadd %s1875, %s1890
          %s1892 = smul.addr %s30, 8
          %s1893 = sadd.s32 %s1888, %s1892
          %s1894 = smul.addr %s1893, 64
          %s1895 = scalar_lea.hbm %s3, %s1894
          %s1897 = sshll.u32 %s1878, 4
          %s1898 = int_to_ptr.vmem [resolvable:$true] %s1897
          %1900 = dma.vmem_to_hbm [thread:$0]  %s1898, 256, %s1895, %s1875
        $region52: #{tpu_custom_call.1} parent=31 // pred_fallthru
          _
        // Predicated region
        $region53: #{tpu_custom_call.1} parent=31 // pred_check
          %p1901 = pneg %p174
        $region54: #{tpu_custom_call.1} parent=31 // pred_check_branch
          %1903 = sbr.rel (%p1901) target = $region56
        $region55: #{tpu_custom_call.1} parent=31 // pred_region
          %s1904 = smul.u32 %s32, %s31
          %s1905 = smul.u32 4, %s1904
          %s1907 = ssub.s32 64, 64
          %1908 = vsyncadd %s1880, %s1907
          %s1909 = smul.addr %s30, 8
          %s1910 = sadd.s32 %s1905, %s1909
          %s1911 = smul.addr %s1910, 16
          %s1912 = scalar_lea.hbm %s4, %s1911
          %s1914 = sshll.u32 %s1883, 4
          %s1915 = int_to_ptr.vmem [resolvable:$true] %s1914
          %1917 = dma.vmem_to_hbm [thread:$0]  %s1915, 64, %s1912, %s1880
        $region56: #{tpu_custom_call.1} parent=31 // pred_fallthru
          _
      $region32: #{tpu_custom_call.1} parent=5 // pred_fallthru
        _
      %p1918 = scmp.le.s32.totalorder 2, %s20
      // Predicated region
      $region57: #{tpu_custom_call.1} parent=5 // pred_check
        %p1919 = pneg %p1918
      $region58: #{tpu_custom_call.1} parent=5 // pred_check_branch
        %1921 = sbr.rel (%p1919) target = $region60
      $region59: #{tpu_custom_call.1} parent=5 // pred_region
        %s1922 = ssub.s32 %s20, 2
        // Predicated region
        $region61: #{tpu_custom_call.1} parent=59 // pred_check
          %p1923 = pneg %p150
        $region62: #{tpu_custom_call.1} parent=59 // pred_check_branch
          %1925 = sbr.rel (%p1923) target = $region64
        $region63: #{tpu_custom_call.1} parent=59 // pred_region
          %s1926 = sand.u32 %s135, 1
          %s1927 = scalar_lea.sflag [#allocation6], %s1926
          %s1928 = sand.u32 %s135, 1
          %s1929 = smul.addr %s1928, 16
          %s1930 = scalar_lea.vmem [#allocation7], %s1929
          %1931 = dma.done %s1927, 256
        $region64: #{tpu_custom_call.1} parent=59 // pred_fallthru
          _
        // Predicated region
        $region65: #{tpu_custom_call.1} parent=59 // pred_check
          %p1932 = pneg %p180
        $region66: #{tpu_custom_call.1} parent=59 // pred_check_branch
          %1934 = sbr.rel (%p1932) target = $region68
        $region67: #{tpu_custom_call.1} parent=59 // pred_region
          %s1935 = sand.u32 %s165, 1
          %s1936 = scalar_lea.sflag [#allocation9], %s1935
          %s1937 = sand.u32 %s165, 1
          %s1938 = smul.addr %s1937, 4
          %s1939 = scalar_lea.vmem [#allocation8], %s1938
          %1940 = dma.done %s1936, 64
        $region68: #{tpu_custom_call.1} parent=59 // pred_fallthru
          _
      $region60: #{tpu_custom_call.1} parent=5 // pred_fallthru
        _
    $region6: #{tpu_custom_call.1} parent=1 // loop_footer
      %s24 = sadd.s32 1, %s20
    $region7: #{tpu_custom_call.1} parent=1 // loop_footer_branch
      %19 = sbr.rel target = $region3
    $region8: #{tpu_custom_call.1} parent=1 // loop_exit
      _
    %1941 = vsyncpa [#allocation5], 1
    %s1942 = scalar_lea.sflag [#allocation5], 1
    %1943 = vsyncpa %s1942, 1
    %1944 = vsyncpa [#allocation6], 1
    %s1945 = scalar_lea.sflag [#allocation6], 1
    %1946 = vsyncpa %s1945, 1
    %1947 = vsyncpa [#allocation9], 1
    %s1948 = scalar_lea.sflag [#allocation9], 1
    %1949 = vsyncpa %s1948, 1

</llo_original>
